<compile_context>
chip_gen: v7x
topology: tpu7x:2x2x1
jax: 0.10.0
libtpu: 0.0.40
codegen_flags: <defaults>
</compile_context>

<pallas_src>
import functools
import math

import jax
import jax.numpy as jnp
from jax.experimental import pallas as pl
from jax.experimental.pallas import tpu as pltpu


MXU_DTYPE = jnp.bfloat16   # matmul operand dtype (accumulation stays f32)
LN_EPS = 1e-5


def _row(v):
    return v.reshape(1, -1)


def _layernorm(y, g, b):
    mu = jnp.mean(y, axis=-1, keepdims=True)
    var = jnp.mean((y - mu) * (y - mu), axis=-1, keepdims=True)
    return (y - mu) * jax.lax.rsqrt(var + LN_EPS) * g + b


def _pick_tm(m, target=256):
    """Row-tile size: multiple of 8, prefer an exact divisor (parallel grid)."""
    if m <= target:
        for cand in range((m // 2 // 8) * 8, 7, -8):
            if m % cand == 0:
                return cand
        return m
    for cand in range(target, 7, -8):
        if m % cand == 0:
            return cand
    return target


# ----------------------------------------------------------------------------
# Pallas kernels
# ----------------------------------------------------------------------------
def linear_kernel(x_ref, w_ref, b_ref, o_ref):
    # o = x @ w + b ; bf16 operands (weights pre-cast), f32 accumulation.
    acc = jnp.dot(x_ref[...].astype(MXU_DTYPE), w_ref[...],
                  preferred_element_type=jnp.float32)
    o_ref[...] = (acc + b_ref[...]).astype(o_ref.dtype)


def value_proj_kernel(x_ref, w_ref, b_ref, keep_ref, o_ref):
    # MSDeformAttn value projection with the padding mask folded into the
    # epilogue; output is emitted in bf16 (halves HBM traffic / VMEM residency).
    acc = jnp.dot(x_ref[...].astype(MXU_DTYPE), w_ref[...],
                  preferred_element_type=jnp.float32) + b_ref[...]
    o_ref[...] = (acc * keep_ref[...]).astype(o_ref.dtype)


def self_attn_block_kernel(tgt_ref, pos_ref, wq_ref, bq_ref, wk_ref, bk_ref,
                           wv_ref, bv_ref, wo_ref, bo_ref, g_ref, b_ref, o_ref,
                           *, n_heads):
    # Fused nn.MultiheadAttention block per batch element.  Weights are
    # pre-split per head ((H, D, dh) / (H, dh, D)) so no dh-wide lane slicing
    # of activations and no concat is needed; the out-projection is
    # accumulated per head.  Softmax scale is pre-baked into Wq/bq.
    x = tgt_ref[...]                                   # (Lq, D) value/residual
    xq = (x + pos_ref[...]).astype(MXU_DTYPE)          # Q/K input
    xv = x.astype(MXU_DTYPE)
    proj = jnp.zeros(x.shape, jnp.float32)
    for h in range(n_heads):                           # static, small (4-8)
        qh = jnp.dot(xq, wq_ref[h], preferred_element_type=jnp.float32) + bq_ref[h]
        kh = jnp.dot(xq, wk_ref[h], preferred_element_type=jnp.float32) + bk_ref[h]
        vh = jnp.dot(xv, wv_ref[h], preferred_element_type=jnp.float32) + bv_ref[h]
        s = jnp.einsum('qd,kd->qk', qh.astype(MXU_DTYPE), kh.astype(MXU_DTYPE),
                       preferred_element_type=jnp.float32)
        s = s - jnp.max(s, axis=-1, keepdims=True)
        pm = jnp.exp(s)
        denom = jnp.sum(pm, axis=-1, keepdims=True)
        oh = jnp.dot(pm.astype(MXU_DTYPE), vh.astype(MXU_DTYPE),
                     preferred_element_type=jnp.float32)
        # Normalize the (Lq, dh) head output instead of the (Lq, Lq) scores.
        oh = oh * pl.reciprocal(denom, approx=True)
        proj = proj + jnp.dot(oh.astype(MXU_DTYPE), wo_ref[h],
                              preferred_element_type=jnp.float32)
    y = x + proj + bo_ref[...]
    o_ref[...] = _layernorm(y, g_ref[...], b_ref[...]).astype(o_ref.dtype)


def deform_attn_block_kernel(idx_ref, v_ref, w_ref, tgt_ref, wo_ref, bo_ref,
                             g_ref, b_ref, o_ref, stack_ref, samp_ref,
                             *, n_heads, n_taps):
    # Fused MSDeformAttn core per batch element.
    #   n_taps = n_levels * n_points * 2 pair-loads per (query, head); each tap
    #   fetches TWO horizontally adjacent corner rows with one dynamic slice.
    #   Gathered rows land in an (lp4, dh) per-head stack; the bilinear x
    #   attention weighted reduction is a single (1, lp4) x (lp4, dh) MXU dot
    #   per head with weights streamed from VMEM (bf16).  The per-query result
    #   is stored as one lane-dense (1, D) row, then out-proj + residual + LN1.
    b = pl.program_id(0)
    lq, d = tgt_ref.shape
    dh = d // n_heads
    base_b = b * (lq * n_heads * n_taps)

    def per_query(q):
        base_q = base_b + q * (n_heads * n_taps)
        for h in range(n_heads):                       # static
            lo = h * dh
            base_h = base_q + h * n_taps
            for t in range(n_taps):                    # static corner-pair taps
                r = idx_ref[base_h + t]
                stack_ref[h, pl.ds(2 * t, 2), :] = v_ref[pl.ds(r, 2), lo:lo + dh]
        outs = []
        for h in range(n_heads):
            wrow = w_ref[h, pl.ds(q, 1), :]            # (1, lp4) bf16 from VMEM
            outs.append(jnp.dot(wrow, stack_ref[h],
                                preferred_element_type=jnp.float32))
        samp_ref[pl.ds(q, 1), :] = jnp.concatenate(outs, axis=-1).astype(
            samp_ref.dtype)

    pl.loop(0, lq)(per_query)

    proj = jnp.dot(samp_ref[...], wo_ref[...],
                   preferred_element_type=jnp.float32) + bo_ref[...]
    o_ref[...] = _layernorm(tgt_ref[...] + proj,
                            g_ref[...], b_ref[...]).astype(o_ref.dtype)


def ffn_block_kernel(x_ref, w1_ref, b1_ref, w2_ref, b2_ref, g_ref, b_ref, o_ref):
    # Fused FFN: relu(x@w1+b1)@w2+b2, residual, LayerNorm(norm3).
    x = x_ref[...]
    h = jnp.dot(x.astype(MXU_DTYPE), w1_ref[...],
                preferred_element_type=jnp.float32) + b1_ref[...]
    h = jnp.maximum(h, 0.0)
    y = jnp.dot(h.astype(MXU_DTYPE), w2_ref[...],
                preferred_element_type=jnp.float32) + b2_ref[...]
    o_ref[...] = _layernorm(x + y, g_ref[...], b_ref[...]).astype(o_ref.dtype)


# ----------------------------------------------------------------------------
# Pallas wrappers
# ----------------------------------------------------------------------------
def pallas_linear(x, w, b, *, target_tm=256):
    m, k = x.shape
    n = w.shape[1]
    tm = _pick_tm(m, target_tm)
    return pl.pallas_call(
        linear_kernel,
        out_shape=jax.ShapeDtypeStruct((m, n), x.dtype),
        grid=(pl.cdiv(m, tm),),
        in_specs=[
            pl.BlockSpec((tm, k), lambda i: (i, 0)),
            pl.BlockSpec((k, n), lambda i: (0, 0)),
            pl.BlockSpec((1, n), lambda i: (0, 0)),
        ],
        out_specs=pl.BlockSpec((tm, n), lambda i: (i, 0)),
        compiler_params=pltpu.CompilerParams(dimension_semantics=("parallel",)),
    )(x, w, _row(b))


def pallas_value_proj(x, w, b, keep, *, target_tm=256):
    m, k = x.shape
    n = w.shape[1]
    tm = _pick_tm(m, target_tm)
    return pl.pallas_call(
        value_proj_kernel,
        out_shape=jax.ShapeDtypeStruct((m, n), jnp.bfloat16),
        grid=(pl.cdiv(m, tm),),
        in_specs=[
            pl.BlockSpec((tm, k), lambda i: (i, 0)),
            pl.BlockSpec((k, n), lambda i: (0, 0)),
            pl.BlockSpec((1, n), lambda i: (0, 0)),
            pl.BlockSpec((tm, 1), lambda i: (i, 0)),
        ],
        out_specs=pl.BlockSpec((tm, n), lambda i: (i, 0)),
        compiler_params=pltpu.CompilerParams(dimension_semantics=("parallel",)),
    )(x, w, _row(b), keep)


def pallas_self_attn_block(tgt, query_pos, p):
    bsz, lq, d = tgt.shape
    n_heads = p["n_heads"]
    seq = pl.BlockSpec((None, lq, d), lambda b: (b, 0, 0))

    def const(arr):
        return pl.BlockSpec(arr.shape, lambda b: (0,) * arr.ndim)

    args = (tgt, query_pos,
            p["sa_wq"], p["sa_bq"], p["sa_wk"], p["sa_bk"],
            p["sa_wv"], p["sa_bv"], p["sa_wo"], _row(p["sa_bo"]),
            _row(p["ln2_g"]), _row(p["ln2_b"]))
    in_specs = [seq, seq] + [const(a) for a in args[2:]]
    return pl.pallas_call(
        functools.partial(self_attn_block_kernel, n_heads=n_heads),
        out_shape=jax.ShapeDtypeStruct((bsz, lq, d), tgt.dtype),
        grid=(bsz,),
        in_specs=in_specs,
        out_specs=seq,
        compiler_params=pltpu.CompilerParams(dimension_semantics=("parallel",)),
    )(*args)


def pallas_deform_attn_block(idx_flat, w_k, value, tgt, p):
    bsz, lq, d = tgt.shape
    len_in = value.shape[1]
    n_heads, n_levels, n_points = p["n_heads"], p["n_levels"], p["n_points"]
    n_taps = n_levels * n_points * 2        # paired-corner loads per (q, h)
    lp4 = 2 * n_taps                        # corner rows per (q, h)
    dh = d // n_heads
    kern = functools.partial(deform_attn_block_kernel,
                             n_heads=n_heads, n_taps=n_taps)
    # TODO(synk): at production shapes (Lq~300, H=8, L=P=4) block the index
    # table per batch / query-tile instead of whole-array scalar prefetch to
    # stay within SMEM; the paired-corner layout already halves its size.
    grid_spec = pltpu.PrefetchScalarGridSpec(
        num_scalar_prefetch=1,
        grid=(bsz,),
        in_specs=[
            pl.BlockSpec((None, len_in, d), lambda b, idx: (b, 0, 0)),         # value (bf16)
            pl.BlockSpec((None, n_heads, lq, lp4), lambda b, idx: (b, 0, 0, 0)),  # weights (bf16)
            pl.BlockSpec((None, lq, d), lambda b, idx: (b, 0, 0)),             # residual
            pl.BlockSpec((d, d), lambda b, idx: (0, 0)),                       # ca_wo
            pl.BlockSpec((1, d), lambda b, idx: (0, 0)),                       # ca_bo
            pl.BlockSpec((1, d), lambda b, idx: (0, 0)),                       # ln1_g
            pl.BlockSpec((1, d), lambda b, idx: (0, 0)),                       # ln1_b
        ],
        out_specs=pl.BlockSpec((None, lq, d), lambda b, idx: (b, 0, 0)),
        scratch_shapes=[
            pltpu.VMEM((n_heads, lp4, dh), jnp.bfloat16),   # gather stacks
            pltpu.VMEM((lq, d), jnp.bfloat16),              # sampled values
        ],
    )
    return pl.pallas_call(
        kern,
        out_shape=jax.ShapeDtypeStruct((bsz, lq, d), tgt.dtype),
        grid_spec=grid_spec,
        compiler_params=pltpu.CompilerParams(
            dimension_semantics=("parallel",),
            vmem_limit_bytes=48 * 1024 * 1024),
    )(idx_flat, value, w_k, tgt,
      p["ca_wo"], _row(p["ca_bo"]), _row(p["ln1_g"]), _row(p["ln1_b"]))


def pallas_ffn_block(x, p):
    m, d = x.shape
    dff = p["ff_w1"].shape[1]
    tm = _pick_tm(m)
    return pl.pallas_call(
        ffn_block_kernel,
        out_shape=jax.ShapeDtypeStruct((m, d), x.dtype),
        grid=(pl.cdiv(m, tm),),
        in_specs=[
            pl.BlockSpec((tm, d), lambda i: (i, 0)),
            pl.BlockSpec((d, dff), lambda i: (0, 0)),
            pl.BlockSpec((1, dff), lambda i: (0, 0)),
            pl.BlockSpec((dff, d), lambda i: (0, 0)),
            pl.BlockSpec((1, d), lambda i: (0, 0)),
            pl.BlockSpec((1, d), lambda i: (0, 0)),
            pl.BlockSpec((1, d), lambda i: (0, 0)),
        ],
        out_specs=pl.BlockSpec((tm, d), lambda i: (i, 0)),
        compiler_params=pltpu.CompilerParams(dimension_semantics=("parallel",)),
    )(x, p["ff_w1"], _row(p["ff_b1"]), p["ff_w2"], _row(p["ff_b2"]),
      _row(p["ln3_g"]), _row(p["ln3_b"]))


# ----------------------------------------------------------------------------
# JAX glue: paired-corner index / weight tables (tiny tensors).
# grid_sample(align_corners=False, padding_mode='zeros') decomposition; the two
# horizontally adjacent corners of each bilinear tap share ONE base row index
# and their weights are mapped onto the two loaded lanes (zero if invalid).
# ----------------------------------------------------------------------------
def _build_gather_tables(off, aw, reference_points, spatial_shapes,
                         level_start_index, len_in):
    bsz, lq, n_heads, n_levels, n_points, _ = off.shape
    wl = spatial_shapes[:, 1].astype(jnp.float32)     # (L,) W per level
    hl = spatial_shapes[:, 0].astype(jnp.float32)     # (L,) H per level
    norm = jnp.stack([wl, hl], axis=-1)               # (L, 2) as (W, H)
    loc = (reference_points[:, :, None, :, None, :]
           + off / norm[None, None, None, :, None, :])

    wb = wl[None, None, None, :, None]                # (1,1,1,L,1)
    hb = hl[None, None, None, :, None]
    start = level_start_index.astype(jnp.float32)[None, None, None, :, None]

    x = loc[..., 0] * wb - 0.5                        # (B,Lq,H,L,P)
    y = loc[..., 1] * hb - 0.5
    x0 = jnp.floor(x)
    y0 = jnp.floor(y)
    tx = x - x0
    ty = y - y0

    # base x of the horizontally adjacent pair, clamped in-level
    bx = jnp.clip(x0, 0.0, jnp.maximum(wb - 2.0, 0.0))
    delta = bx - x0                                   # 0 in the interior
    lane_w = []
    for j in (0, 1):                                  # lane j reads column bx+j
        dj = delta + float(j)
        wx = jnp.where(dj == 0.0, 1.0 - tx, jnp.where(dj == 1.0, tx, 0.0))
        wx = wx * (bx + float(j) <= wb - 1.0)         # guards W == 1 levels
        lane_w.append(wx)
    lane_w = jnp.stack(lane_w, axis=-1)               # (B,Lq,H,L,P,2)

    idx_list, w_list = [], []
    for pair in (0, 1):                               # y0 row / y0+1 row
        yp = y0 + float(pair)
        wy_base = (1.0 - ty) if pair == 0 else ty
        wy = wy_base * ((yp >= 0.0) & (yp <= hb - 1.0))
        yc = jnp.clip(yp, 0.0, hb - 1.0)
        base = start + yc * wb + bx
        base = jnp.minimum(base, float(len_in - 2))   # keep the 2-row load in bounds
        idx_list.append(base)
        w_list.append(wy[..., None] * lane_w)         # (B,Lq,H,L,P,2)
    idx = jnp.stack(idx_list, axis=-1)                # (B,Lq,H,L,P,2pair)
    w = jnp.stack(w_list, axis=-2)                    # (B,Lq,H,L,P,2pair,2lane)
    w = w * aw[..., None, None]

    idx_flat = idx.astype(jnp.int32).reshape(-1)      # order (b,q,h,l,p,pair)
    lp4 = n_levels * n_points * 4
    w_k = jnp.transpose(w.reshape(bsz, lq, n_heads, lp4),
                        (0, 2, 1, 3)).astype(jnp.bfloat16)   # (B,H,Lq,lp4) VMEM
    return idx_flat, w_k


# ----------------------------------------------------------------------------
# Full decoder-layer forward (eval mode: dropout = identity)
# ----------------------------------------------------------------------------
def deformable_decoder_layer_forward(
    p, tgt, query_pos, reference_points, src,
    src_spatial_shapes, level_start_index, src_padding_mask=None,
):
    bsz, lq, d = tgt.shape
    n_heads, n_levels, n_points = p["n_heads"], p["n_levels"], p["n_points"]
    len_in = src.shape[1]

    # --- self-attention block (per-head proj + MHA + out-proj + res + LN2) ---
    tgt = pallas_self_attn_block(tgt, query_pos, p)

    # --- deformable cross-attention (MSDeformAttn) ---
    if src_padding_mask is None:
        keep = jnp.ones((bsz * len_in, 1), jnp.float32)
    else:
        keep = jnp.where(src_padding_mask.reshape(-1, 1), 0.0, 1.0).astype(jnp.float32)
    value = pallas_value_proj(src.reshape(bsz * len_in, d), p["ca_wv"],
                              p["ca_bv"], keep).reshape(bsz, len_in, d)   # bf16

    query = (tgt + query_pos).reshape(bsz * lq, d)
    offaw = pallas_linear(query, p["ca_woffaw"], p["ca_boffaw"])  # fused off+aw proj
    n_off = n_heads * n_levels * n_points * 2
    off = offaw[:, :n_off].reshape(bsz, lq, n_heads, n_levels, n_points, 2)
    # TODO(synk): fold this tiny per-head-group softmax into the offaw kernel epilogue.
    aw = jax.nn.softmax(
        offaw[:, n_off:].reshape(bsz, lq, n_heads, n_levels * n_points), axis=-1
    ).reshape(bsz, lq, n_heads, n_levels, n_points)

    idx_flat, w_k = _build_gather_tables(
        off, aw, reference_points, src_spatial_shapes, level_start_index, len_in)
    tgt = pallas_deform_attn_block(idx_flat, w_k, value, tgt, p)

    # --- FFN + residual + LayerNorm (fused, row-tiled) ---
    out = pallas_ffn_block(tgt.reshape(bsz * lq, d), p)
    return out.reshape(bsz, lq, d)


# ----------------------------------------------------------------------------
# Deterministic parameter init (synthetic; shapes match the PyTorch module,
# with weights pre-split / pre-cast for the kernels).
# ----------------------------------------------------------------------------
def init_params(key, d_model, n_heads, n_levels, n_points, d_ffn):
    keys = iter(jax.random.split(key, 32))
    dh = d_model // n_heads
    scale = 1.0 / math.sqrt(dh)

    def w(shape, s=0.05):
        return jax.random.normal(next(keys), shape, jnp.float32) * s

    p = dict(n_heads=n_heads, n_levels=n_levels, n_points=n_points)
    # self-attention (nn.MultiheadAttention); per-head weights, scale baked into Wq/bq
    p["sa_wq"] = (w((n_heads, d_model, dh)) * scale).astype(MXU_DTYPE)
    p["sa_bq"] = w((n_heads, 1, dh)) * scale
    p["sa_wk"] = w((n_heads, d_model, dh)).astype(MXU_DTYPE)
    p["sa_bk"] = w((n_heads, 1, dh))
    p["sa_wv"] = w((n_heads, d_model, dh)).astype(MXU_DTYPE)
    p["sa_bv"] = w((n_heads, 1, dh))
    p["sa_wo"] = w((n_heads, dh, d_model)).astype(MXU_DTYPE)
    p["sa_bo"] = w((d_model,))
    p["ln2_g"] = jnp.ones((d_model,), jnp.float32)
    p["ln2_b"] = jnp.zeros((d_model,), jnp.float32)
    # MSDeformAttn; sampling_offsets & attention_weights projections fused
    p["ca_wv"] = w((d_model, d_model)).astype(MXU_DTYPE)
    p["ca_bv"] = w((d_model,))
    n_offaw = n_heads * n_levels * n_points * 3
    p["ca_woffaw"] = w((d_model, n_offaw)).astype(MXU_DTYPE)
    p["ca_boffaw"] = w((n_offaw,))
    p["ca_wo"] = w((d_model, d_model)).astype(MXU_DTYPE)
    p["ca_bo"] = w((d_model,))
    p["ln1_g"] = jnp.ones((d_model,), jnp.float32)
    p["ln1_b"] = jnp.zeros((d_model,), jnp.float32)
    # FFN
    p["ff_w1"] = w((d_model, d_ffn)).astype(MXU_DTYPE)
    p["ff_b1"] = w((d_ffn,))
    p["ff_w2"] = w((d_ffn, d_model)).astype(MXU_DTYPE)
    p["ff_b2"] = w((d_model,))
    p["ln3_g"] = jnp.ones((d_model,), jnp.float32)
    p["ln3_b"] = jnp.zeros((d_model,), jnp.float32)
    return p


if __name__ == "__main__":
    B, Lq, D, H, L, P, d_ffn = 2, 8, 32, 4, 2, 2, 64
    spatial_shapes = jnp.array([[4, 4], [2, 2]], dtype=jnp.int32)   # (H, W) per level
    level_start_index = jnp.array([0, 16], dtype=jnp.int32)
    Len_in = 4 * 4 + 2 * 2  # 20

    key = jax.random.PRNGKey(0)
    k0, k1, k2, k3, k4 = jax.random.split(key, 5)
    tgt = jax.random.normal(k0, (B, Lq, D), jnp.float32)
    query_pos = jax.random.normal(k1, (B, Lq, D), jnp.float32)
    reference_points = jax.random.uniform(k2, (B, Lq, L, 2), jnp.float32)
    src = jax.random.normal(k3, (B, Len_in, D), jnp.float32)
    params = init_params(k4, D, H, L, P, d_ffn)

    out = deformable_decoder_layer_forward(
        params, tgt, query_pos, reference_points, src,
        spatial_shapes, level_start_index, None,
    )
    jax.block_until_ready(out)
    assert out.shape == (B, Lq, D)
    assert bool(jnp.all(jnp.isfinite(out)))
    print("KERNEL_OK")
</pallas_src>

<mosaic_0001>
module attributes {stable_mosaic.version = 11 : i64} {
  func.func @self_attn_block_kernel(%arg0: i32, %arg1: memref<1x8x32xf32, #tpu.memory_space<vmem>>, %arg2: memref<1x8x32xf32, #tpu.memory_space<vmem>>, %arg3: memref<4x32x8xbf16, #tpu.memory_space<vmem>>, %arg4: memref<4x1x8xf32, #tpu.memory_space<vmem>>, %arg5: memref<4x32x8xbf16, #tpu.memory_space<vmem>>, %arg6: memref<4x1x8xf32, #tpu.memory_space<vmem>>, %arg7: memref<4x32x8xbf16, #tpu.memory_space<vmem>>, %arg8: memref<4x1x8xf32, #tpu.memory_space<vmem>>, %arg9: memref<4x8x32xbf16, #tpu.memory_space<vmem>>, %arg10: memref<1x32xf32, #tpu.memory_space<vmem>>, %arg11: memref<1x32xf32, #tpu.memory_space<vmem>>, %arg12: memref<1x32xf32, #tpu.memory_space<vmem>>, %arg13: memref<1x8x32xf32, #tpu.memory_space<vmem>>) attributes {dimension_semantics = [#tpu.dimension_semantics<parallel>], iteration_bounds = array<i64: 2>, scalar_prefetch = 0 : i64, scratch_operands = 0 : i64, tpu.core_type = #tpu.core_type<tc>, window_params = [{transform_indices = @transform_0, window_bounds = array<i64: 1, 8, 32>}, {transform_indices = @transform_1, window_bounds = array<i64: 1, 8, 32>}, {pipeline_mode = #tpu.pipeline_mode<synchronous>, transform_indices = @transform_2, window_bounds = array<i64: 4, 32, 8>}, {pipeline_mode = #tpu.pipeline_mode<synchronous>, transform_indices = @transform_3, window_bounds = array<i64: 4, 1, 8>}, {pipeline_mode = #tpu.pipeline_mode<synchronous>, transform_indices = @transform_4, window_bounds = array<i64: 4, 32, 8>}, {pipeline_mode = #tpu.pipeline_mode<synchronous>, transform_indices = @transform_5, window_bounds = array<i64: 4, 1, 8>}, {pipeline_mode = #tpu.pipeline_mode<synchronous>, transform_indices = @transform_6, window_bounds = array<i64: 4, 32, 8>}, {pipeline_mode = #tpu.pipeline_mode<synchronous>, transform_indices = @transform_7, window_bounds = array<i64: 4, 1, 8>}, {pipeline_mode = #tpu.pipeline_mode<synchronous>, transform_indices = @transform_8, window_bounds = array<i64: 4, 8, 32>}, {pipeline_mode = #tpu.pipeline_mode<synchronous>, transform_indices = @transform_9, window_bounds = array<i64: 1, 32>}, {pipeline_mode = #tpu.pipeline_mode<synchronous>, transform_indices = @transform_10, window_bounds = array<i64: 1, 32>}, {pipeline_mode = #tpu.pipeline_mode<synchronous>, transform_indices = @transform_11, window_bounds = array<i64: 1, 32>}, {transform_indices = @transform_12, window_bounds = array<i64: 1, 8, 32>}]} {
    %c0 = arith.constant 0 : index
    %c0_0 = arith.constant 0 : index
    %c0_1 = arith.constant 0 : index
    %0 = vector.load %arg1[%c0, %c0_0, %c0_1] : memref<1x8x32xf32, #tpu.memory_space<vmem>>, vector<1x8x32xf32>
    %1 = vector.shape_cast %0 : vector<1x8x32xf32> to vector<8x32xf32>
    %c0_2 = arith.constant 0 : index
    %c0_3 = arith.constant 0 : index
    %c0_4 = arith.constant 0 : index
    %2 = vector.load %arg2[%c0_2, %c0_3, %c0_4] : memref<1x8x32xf32, #tpu.memory_space<vmem>>, vector<1x8x32xf32>
    %3 = vector.shape_cast %2 : vector<1x8x32xf32> to vector<8x32xf32>
    %4 = arith.addf %1, %3 : vector<8x32xf32>
    %5 = arith.truncf %4 : vector<8x32xf32> to vector<8x32xbf16>
    %6 = arith.truncf %1 : vector<8x32xf32> to vector<8x32xbf16>
    %cst = arith.constant 0.000000e+00 : f32
    %7 = vector.broadcast %cst : f32 to vector<8x32xf32>
    %c0_5 = arith.constant 0 : index
    %c0_6 = arith.constant 0 : index
    %c0_7 = arith.constant 0 : index
    %8 = vector.load %arg3[%c0_5, %c0_6, %c0_7] : memref<4x32x8xbf16, #tpu.memory_space<vmem>>, vector<1x32x8xbf16>
    %9 = vector.shape_cast %8 : vector<1x32x8xbf16> to vector<32x8xbf16>
    %cst_8 = arith.constant dense<0.000000e+00> : vector<8x8xf32>
    %10 = tpu.matmul %5, %9, %cst_8 {dimension_numbers = #tpu.dot_dimension_numbers<[1], [0], [0], [1], [0, 0, 1, 1], [], []>} : vector<8x32xbf16>, vector<32x8xbf16>, vector<8x8xf32> -> vector<8x8xf32>
    %c0_9 = arith.constant 0 : index
    %c0_10 = arith.constant 0 : index
    %c0_11 = arith.constant 0 : index
    %11 = vector.load %arg4[%c0_9, %c0_10, %c0_11] : memref<4x1x8xf32, #tpu.memory_space<vmem>>, vector<1x1x8xf32>
    %12 = vector.shape_cast %11 : vector<1x1x8xf32> to vector<1x8xf32>
    %13 = vector.broadcast %12 : vector<1x8xf32> to vector<8x8xf32>
    %14 = arith.addf %10, %13 : vector<8x8xf32>
    %c0_12 = arith.constant 0 : index
    %c0_13 = arith.constant 0 : index
    %c0_14 = arith.constant 0 : index
    %15 = vector.load %arg5[%c0_12, %c0_13, %c0_14] : memref<4x32x8xbf16, #tpu.memory_space<vmem>>, vector<1x32x8xbf16>
    %16 = vector.shape_cast %15 : vector<1x32x8xbf16> to vector<32x8xbf16>
    %cst_15 = arith.constant dense<0.000000e+00> : vector<8x8xf32>
    %17 = tpu.matmul %5, %16, %cst_15 {dimension_numbers = #tpu.dot_dimension_numbers<[1], [0], [0], [1], [0, 0, 1, 1], [], []>} : vector<8x32xbf16>, vector<32x8xbf16>, vector<8x8xf32> -> vector<8x8xf32>
    %c0_16 = arith.constant 0 : index
    %c0_17 = arith.constant 0 : index
    %c0_18 = arith.constant 0 : index
    %18 = vector.load %arg6[%c0_16, %c0_17, %c0_18] : memref<4x1x8xf32, #tpu.memory_space<vmem>>, vector<1x1x8xf32>
    %19 = vector.shape_cast %18 : vector<1x1x8xf32> to vector<1x8xf32>
    %20 = vector.broadcast %19 : vector<1x8xf32> to vector<8x8xf32>
    %21 = arith.addf %17, %20 : vector<8x8xf32>
    %c0_19 = arith.constant 0 : index
    %c0_20 = arith.constant 0 : index
    %c0_21 = arith.constant 0 : index
    %22 = vector.load %arg7[%c0_19, %c0_20, %c0_21] : memref<4x32x8xbf16, #tpu.memory_space<vmem>>, vector<1x32x8xbf16>
    %23 = vector.shape_cast %22 : vector<1x32x8xbf16> to vector<32x8xbf16>
    %cst_22 = arith.constant dense<0.000000e+00> : vector<8x8xf32>
    %24 = tpu.matmul %6, %23, %cst_22 {dimension_numbers = #tpu.dot_dimension_numbers<[1], [0], [0], [1], [0, 0, 1, 1], [], []>} : vector<8x32xbf16>, vector<32x8xbf16>, vector<8x8xf32> -> vector<8x8xf32>
    %c0_23 = arith.constant 0 : index
    %c0_24 = arith.constant 0 : index
    %c0_25 = arith.constant 0 : index
    %25 = vector.load %arg8[%c0_23, %c0_24, %c0_25] : memref<4x1x8xf32, #tpu.memory_space<vmem>>, vector<1x1x8xf32>
    %26 = vector.shape_cast %25 : vector<1x1x8xf32> to vector<1x8xf32>
    %27 = vector.broadcast %26 : vector<1x8xf32> to vector<8x8xf32>
    %28 = arith.addf %24, %27 : vector<8x8xf32>
    %29 = arith.truncf %14 : vector<8x8xf32> to vector<8x8xbf16>
    %30 = arith.truncf %21 : vector<8x8xf32> to vector<8x8xbf16>
    "tpu.trace_start"() <{level = 10 : i32, message = "qd,kd->qk"}> : () -> ()
    %cst_26 = arith.constant dense<0.000000e+00> : vector<8x8xf32>
    %31 = tpu.matmul %29, %30, %cst_26 {dimension_numbers = #tpu.dot_dimension_numbers<[1], [1], [0], [0], [0, 0, 1, 0], [], []>} : vector<8x8xbf16>, vector<8x8xbf16>, vector<8x8xf32> -> vector<8x8xf32>
    "tpu.trace_stop"() : () -> ()
    %cst_27 = arith.constant dense<0xFF800000> : vector<8xf32>
    %32 = vector.multi_reduction <maximumf>, %31, %cst_27 [1] : vector<8x8xf32> to vector<8xf32>
    %33 = vector.shape_cast %32 : vector<8xf32> to vector<8x1xf32>
    %34 = vector.broadcast %33 : vector<8x1xf32> to vector<8x8xf32>
    %35 = arith.subf %31, %34 : vector<8x8xf32>
    %36 = math.exp %35 : vector<8x8xf32>
    %cst_28 = arith.constant dense<0.000000e+00> : vector<8xf32>
    %37 = vector.multi_reduction <add>, %36, %cst_28 [1] : vector<8x8xf32> to vector<8xf32>
    %38 = vector.shape_cast %37 : vector<8xf32> to vector<8x1xf32>
    %39 = arith.truncf %36 : vector<8x8xf32> to vector<8x8xbf16>
    %40 = arith.truncf %28 : vector<8x8xf32> to vector<8x8xbf16>
    %cst_29 = arith.constant dense<0.000000e+00> : vector<8x8xf32>
    %41 = tpu.matmul %39, %40, %cst_29 {dimension_numbers = #tpu.dot_dimension_numbers<[1], [0], [0], [1], [0, 0, 1, 1], [], []>} : vector<8x8xbf16>, vector<8x8xbf16>, vector<8x8xf32> -> vector<8x8xf32>
    %42 = tpu.reciprocal %38 {approx = true} : vector<8x1xf32> -> vector<8x1xf32>
    %43 = vector.broadcast %42 : vector<8x1xf32> to vector<8x8xf32>
    %44 = arith.mulf %41, %43 : vector<8x8xf32>
    %45 = arith.truncf %44 : vector<8x8xf32> to vector<8x8xbf16>
    %c0_30 = arith.constant 0 : index
    %c0_31 = arith.constant 0 : index
    %c0_32 = arith.constant 0 : index
    %46 = vector.load %arg9[%c0_30, %c0_31, %c0_32] : memref<4x8x32xbf16, #tpu.memory_space<vmem>>, vector<1x8x32xbf16>
    %47 = vector.shape_cast %46 : vector<1x8x32xbf16> to vector<8x32xbf16>
    %cst_33 = arith.constant dense<0.000000e+00> : vector<8x32xf32>
    %48 = tpu.matmul %45, %47, %cst_33 {dimension_numbers = #tpu.dot_dimension_numbers<[1], [0], [0], [1], [0, 0, 1, 1], [], []>} : vector<8x8xbf16>, vector<8x32xbf16>, vector<8x32xf32> -> vector<8x32xf32>
    %49 = arith.addf %7, %48 : vector<8x32xf32>
    %c1 = arith.constant 1 : index
    %c0_34 = arith.constant 0 : index
    %c0_35 = arith.constant 0 : index
    %50 = vector.load %arg3[%c1, %c0_34, %c0_35] : memref<4x32x8xbf16, #tpu.memory_space<vmem>>, vector<1x32x8xbf16>
    %51 = vector.shape_cast %50 : vector<1x32x8xbf16> to vector<32x8xbf16>
    %cst_36 = arith.constant dense<0.000000e+00> : vector<8x8xf32>
    %52 = tpu.matmul %5, %51, %cst_36 {dimension_numbers = #tpu.dot_dimension_numbers<[1], [0], [0], [1], [0, 0, 1, 1], [], []>} : vector<8x32xbf16>, vector<32x8xbf16>, vector<8x8xf32> -> vector<8x8xf32>
    %c1_37 = arith.constant 1 : index
    %c0_38 = arith.constant 0 : index
    %c0_39 = arith.constant 0 : index
    %53 = vector.load %arg4[%c1_37, %c0_38, %c0_39] : memref<4x1x8xf32, #tpu.memory_space<vmem>>, vector<1x1x8xf32>
    %54 = vector.shape_cast %53 : vector<1x1x8xf32> to vector<1x8xf32>
    %55 = vector.broadcast %54 : vector<1x8xf32> to vector<8x8xf32>
    %56 = arith.addf %52, %55 : vector<8x8xf32>
    %c1_40 = arith.constant 1 : index
    %c0_41 = arith.constant 0 : index
    %c0_42 = arith.constant 0 : index
    %57 = vector.load %arg5[%c1_40, %c0_41, %c0_42] : memref<4x32x8xbf16, #tpu.memory_space<vmem>>, vector<1x32x8xbf16>
    %58 = vector.shape_cast %57 : vector<1x32x8xbf16> to vector<32x8xbf16>
    %cst_43 = arith.constant dense<0.000000e+00> : vector<8x8xf32>
    %59 = tpu.matmul %5, %58, %cst_43 {dimension_numbers = #tpu.dot_dimension_numbers<[1], [0], [0], [1], [0, 0, 1, 1], [], []>} : vector<8x32xbf16>, vector<32x8xbf16>, vector<8x8xf32> -> vector<8x8xf32>
    %c1_44 = arith.constant 1 : index
    %c0_45 = arith.constant 0 : index
    %c0_46 = arith.constant 0 : index
    %60 = vector.load %arg6[%c1_44, %c0_45, %c0_46] : memref<4x1x8xf32, #tpu.memory_space<vmem>>, vector<1x1x8xf32>
    %61 = vector.shape_cast %60 : vector<1x1x8xf32> to vector<1x8xf32>
    %62 = vector.broadcast %61 : vector<1x8xf32> to vector<8x8xf32>
    %63 = arith.addf %59, %62 : vector<8x8xf32>
    %c1_47 = arith.constant 1 : index
    %c0_48 = arith.constant 0 : index
    %c0_49 = arith.constant 0 : index
    %64 = vector.load %arg7[%c1_47, %c0_48, %c0_49] : memref<4x32x8xbf16, #tpu.memory_space<vmem>>, vector<1x32x8xbf16>
    %65 = vector.shape_cast %64 : vector<1x32x8xbf16> to vector<32x8xbf16>
    %cst_50 = arith.constant dense<0.000000e+00> : vector<8x8xf32>
    %66 = tpu.matmul %6, %65, %cst_50 {dimension_numbers = #tpu.dot_dimension_numbers<[1], [0], [0], [1], [0, 0, 1, 1], [], []>} : vector<8x32xbf16>, vector<32x8xbf16>, vector<8x8xf32> -> vector<8x8xf32>
    %c1_51 = arith.constant 1 : index
    %c0_52 = arith.constant 0 : index
    %c0_53 = arith.constant 0 : index
    %67 = vector.load %arg8[%c1_51, %c0_52, %c0_53] : memref<4x1x8xf32, #tpu.memory_space<vmem>>, vector<1x1x8xf32>
    %68 = vector.shape_cast %67 : vector<1x1x8xf32> to vector<1x8xf32>
    %69 = vector.broadcast %68 : vector<1x8xf32> to vector<8x8xf32>
    %70 = arith.addf %66, %69 : vector<8x8xf32>
    %71 = arith.truncf %56 : vector<8x8xf32> to vector<8x8xbf16>
    %72 = arith.truncf %63 : vector<8x8xf32> to vector<8x8xbf16>
    "tpu.trace_start"() <{level = 10 : i32, message = "qd,kd->qk"}> : () -> ()
    %cst_54 = arith.constant dense<0.000000e+00> : vector<8x8xf32>
    %73 = tpu.matmul %71, %72, %cst_54 {dimension_numbers = #tpu.dot_dimension_numbers<[1], [1], [0], [0], [0, 0, 1, 0], [], []>} : vector<8x8xbf16>, vector<8x8xbf16>, vector<8x8xf32> -> vector<8x8xf32>
    "tpu.trace_stop"() : () -> ()
    %cst_55 = arith.constant dense<0xFF800000> : vector<8xf32>
    %74 = vector.multi_reduction <maximumf>, %73, %cst_55 [1] : vector<8x8xf32> to vector<8xf32>
    %75 = vector.shape_cast %74 : vector<8xf32> to vector<8x1xf32>
    %76 = vector.broadcast %75 : vector<8x1xf32> to vector<8x8xf32>
    %77 = arith.subf %73, %76 : vector<8x8xf32>
    %78 = math.exp %77 : vector<8x8xf32>
    %cst_56 = arith.constant dense<0.000000e+00> : vector<8xf32>
    %79 = vector.multi_reduction <add>, %78, %cst_56 [1] : vector<8x8xf32> to vector<8xf32>
    %80 = vector.shape_cast %79 : vector<8xf32> to vector<8x1xf32>
    %81 = arith.truncf %78 : vector<8x8xf32> to vector<8x8xbf16>
    %82 = arith.truncf %70 : vector<8x8xf32> to vector<8x8xbf16>
    %cst_57 = arith.constant dense<0.000000e+00> : vector<8x8xf32>
    %83 = tpu.matmul %81, %82, %cst_57 {dimension_numbers = #tpu.dot_dimension_numbers<[1], [0], [0], [1], [0, 0, 1, 1], [], []>} : vector<8x8xbf16>, vector<8x8xbf16>, vector<8x8xf32> -> vector<8x8xf32>
    %84 = tpu.reciprocal %80 {approx = true} : vector<8x1xf32> -> vector<8x1xf32>
    %85 = vector.broadcast %84 : vector<8x1xf32> to vector<8x8xf32>
    %86 = arith.mulf %83, %85 : vector<8x8xf32>
    %87 = arith.truncf %86 : vector<8x8xf32> to vector<8x8xbf16>
    %c1_58 = arith.constant 1 : index
    %c0_59 = arith.constant 0 : index
    %c0_60 = arith.constant 0 : index
    %88 = vector.load %arg9[%c1_58, %c0_59, %c0_60] : memref<4x8x32xbf16, #tpu.memory_space<vmem>>, vector<1x8x32xbf16>
    %89 = vector.shape_cast %88 : vector<1x8x32xbf16> to vector<8x32xbf16>
    %cst_61 = arith.constant dense<0.000000e+00> : vector<8x32xf32>
    %90 = tpu.matmul %87, %89, %cst_61 {dimension_numbers = #tpu.dot_dimension_numbers<[1], [0], [0], [1], [0, 0, 1, 1], [], []>} : vector<8x8xbf16>, vector<8x32xbf16>, vector<8x32xf32> -> vector<8x32xf32>
    %91 = arith.addf %49, %90 : vector<8x32xf32>
    %c2 = arith.constant 2 : index
    %c0_62 = arith.constant 0 : index
    %c0_63 = arith.constant 0 : index
    %92 = vector.load %arg3[%c2, %c0_62, %c0_63] : memref<4x32x8xbf16, #tpu.memory_space<vmem>>, vector<1x32x8xbf16>
    %93 = vector.shape_cast %92 : vector<1x32x8xbf16> to vector<32x8xbf16>
    %cst_64 = arith.constant dense<0.000000e+00> : vector<8x8xf32>
    %94 = tpu.matmul %5, %93, %cst_64 {dimension_numbers = #tpu.dot_dimension_numbers<[1], [0], [0], [1], [0, 0, 1, 1], [], []>} : vector<8x32xbf16>, vector<32x8xbf16>, vector<8x8xf32> -> vector<8x8xf32>
    %c2_65 = arith.constant 2 : index
    %c0_66 = arith.constant 0 : index
    %c0_67 = arith.constant 0 : index
    %95 = vector.load %arg4[%c2_65, %c0_66, %c0_67] : memref<4x1x8xf32, #tpu.memory_space<vmem>>, vector<1x1x8xf32>
    %96 = vector.shape_cast %95 : vector<1x1x8xf32> to vector<1x8xf32>
    %97 = vector.broadcast %96 : vector<1x8xf32> to vector<8x8xf32>
    %98 = arith.addf %94, %97 : vector<8x8xf32>
    %c2_68 = arith.constant 2 : index
    %c0_69 = arith.constant 0 : index
    %c0_70 = arith.constant 0 : index
    %99 = vector.load %arg5[%c2_68, %c0_69, %c0_70] : memref<4x32x8xbf16, #tpu.memory_space<vmem>>, vector<1x32x8xbf16>
    %100 = vector.shape_cast %99 : vector<1x32x8xbf16> to vector<32x8xbf16>
    %cst_71 = arith.constant dense<0.000000e+00> : vector<8x8xf32>
    %101 = tpu.matmul %5, %100, %cst_71 {dimension_numbers = #tpu.dot_dimension_numbers<[1], [0], [0], [1], [0, 0, 1, 1], [], []>} : vector<8x32xbf16>, vector<32x8xbf16>, vector<8x8xf32> -> vector<8x8xf32>
    %c2_72 = arith.constant 2 : index
    %c0_73 = arith.constant 0 : index
    %c0_74 = arith.constant 0 : index
    %102 = vector.load %arg6[%c2_72, %c0_73, %c0_74] : memref<4x1x8xf32, #tpu.memory_space<vmem>>, vector<1x1x8xf32>
    %103 = vector.shape_cast %102 : vector<1x1x8xf32> to vector<1x8xf32>
    %104 = vector.broadcast %103 : vector<1x8xf32> to vector<8x8xf32>
    %105 = arith.addf %101, %104 : vector<8x8xf32>
    %c2_75 = arith.constant 2 : index
    %c0_76 = arith.constant 0 : index
    %c0_77 = arith.constant 0 : index
    %106 = vector.load %arg7[%c2_75, %c0_76, %c0_77] : memref<4x32x8xbf16, #tpu.memory_space<vmem>>, vector<1x32x8xbf16>
    %107 = vector.shape_cast %106 : vector<1x32x8xbf16> to vector<32x8xbf16>
    %cst_78 = arith.constant dense<0.000000e+00> : vector<8x8xf32>
    %108 = tpu.matmul %6, %107, %cst_78 {dimension_numbers = #tpu.dot_dimension_numbers<[1], [0], [0], [1], [0, 0, 1, 1], [], []>} : vector<8x32xbf16>, vector<32x8xbf16>, vector<8x8xf32> -> vector<8x8xf32>
    %c2_79 = arith.constant 2 : index
    %c0_80 = arith.constant 0 : index
    %c0_81 = arith.constant 0 : index
    %109 = vector.load %arg8[%c2_79, %c0_80, %c0_81] : memref<4x1x8xf32, #tpu.memory_space<vmem>>, vector<1x1x8xf32>
    %110 = vector.shape_cast %109 : vector<1x1x8xf32> to vector<1x8xf32>
    %111 = vector.broadcast %110 : vector<1x8xf32> to vector<8x8xf32>
    %112 = arith.addf %108, %111 : vector<8x8xf32>
    %113 = arith.truncf %98 : vector<8x8xf32> to vector<8x8xbf16>
    %114 = arith.truncf %105 : vector<8x8xf32> to vector<8x8xbf16>
    "tpu.trace_start"() <{level = 10 : i32, message = "qd,kd->qk"}> : () -> ()
    %cst_82 = arith.constant dense<0.000000e+00> : vector<8x8xf32>
    %115 = tpu.matmul %113, %114, %cst_82 {dimension_numbers = #tpu.dot_dimension_numbers<[1], [1], [0], [0], [0, 0, 1, 0], [], []>} : vector<8x8xbf16>, vector<8x8xbf16>, vector<8x8xf32> -> vector<8x8xf32>
    "tpu.trace_stop"() : () -> ()
    %cst_83 = arith.constant dense<0xFF800000> : vector<8xf32>
    %116 = vector.multi_reduction <maximumf>, %115, %cst_83 [1] : vector<8x8xf32> to vector<8xf32>
    %117 = vector.shape_cast %116 : vector<8xf32> to vector<8x1xf32>
    %118 = vector.broadcast %117 : vector<8x1xf32> to vector<8x8xf32>
    %119 = arith.subf %115, %118 : vector<8x8xf32>
    %120 = math.exp %119 : vector<8x8xf32>
    %cst_84 = arith.constant dense<0.000000e+00> : vector<8xf32>
    %121 = vector.multi_reduction <add>, %120, %cst_84 [1] : vector<8x8xf32> to vector<8xf32>
    %122 = vector.shape_cast %121 : vector<8xf32> to vector<8x1xf32>
    %123 = arith.truncf %120 : vector<8x8xf32> to vector<8x8xbf16>
    %124 = arith.truncf %112 : vector<8x8xf32> to vector<8x8xbf16>
    %cst_85 = arith.constant dense<0.000000e+00> : vector<8x8xf32>
    %125 = tpu.matmul %123, %124, %cst_85 {dimension_numbers = #tpu.dot_dimension_numbers<[1], [0], [0], [1], [0, 0, 1, 1], [], []>} : vector<8x8xbf16>, vector<8x8xbf16>, vector<8x8xf32> -> vector<8x8xf32>
    %126 = tpu.reciprocal %122 {approx = true} : vector<8x1xf32> -> vector<8x1xf32>
    %127 = vector.broadcast %126 : vector<8x1xf32> to vector<8x8xf32>
    %128 = arith.mulf %125, %127 : vector<8x8xf32>
    %129 = arith.truncf %128 : vector<8x8xf32> to vector<8x8xbf16>
    %c2_86 = arith.constant 2 : index
    %c0_87 = arith.constant 0 : index
    %c0_88 = arith.constant 0 : index
    %130 = vector.load %arg9[%c2_86, %c0_87, %c0_88] : memref<4x8x32xbf16, #tpu.memory_space<vmem>>, vector<1x8x32xbf16>
    %131 = vector.shape_cast %130 : vector<1x8x32xbf16> to vector<8x32xbf16>
    %cst_89 = arith.constant dense<0.000000e+00> : vector<8x32xf32>
    %132 = tpu.matmul %129, %131, %cst_89 {dimension_numbers = #tpu.dot_dimension_numbers<[1], [0], [0], [1], [0, 0, 1, 1], [], []>} : vector<8x8xbf16>, vector<8x32xbf16>, vector<8x32xf32> -> vector<8x32xf32>
    %133 = arith.addf %91, %132 : vector<8x32xf32>
    %c3 = arith.constant 3 : index
    %c0_90 = arith.constant 0 : index
    %c0_91 = arith.constant 0 : index
    %134 = vector.load %arg3[%c3, %c0_90, %c0_91] : memref<4x32x8xbf16, #tpu.memory_space<vmem>>, vector<1x32x8xbf16>
    %135 = vector.shape_cast %134 : vector<1x32x8xbf16> to vector<32x8xbf16>
    %cst_92 = arith.constant dense<0.000000e+00> : vector<8x8xf32>
    %136 = tpu.matmul %5, %135, %cst_92 {dimension_numbers = #tpu.dot_dimension_numbers<[1], [0], [0], [1], [0, 0, 1, 1], [], []>} : vector<8x32xbf16>, vector<32x8xbf16>, vector<8x8xf32> -> vector<8x8xf32>
    %c3_93 = arith.constant 3 : index
    %c0_94 = arith.constant 0 : index
    %c0_95 = arith.constant 0 : index
    %137 = vector.load %arg4[%c3_93, %c0_94, %c0_95] : memref<4x1x8xf32, #tpu.memory_space<vmem>>, vector<1x1x8xf32>
    %138 = vector.shape_cast %137 : vector<1x1x8xf32> to vector<1x8xf32>
    %139 = vector.broadcast %138 : vector<1x8xf32> to vector<8x8xf32>
    %140 = arith.addf %136, %139 : vector<8x8xf32>
    %c3_96 = arith.constant 3 : index
    %c0_97 = arith.constant 0 : index
    %c0_98 = arith.constant 0 : index
    %141 = vector.load %arg5[%c3_96, %c0_97, %c0_98] : memref<4x32x8xbf16, #tpu.memory_space<vmem>>, vector<1x32x8xbf16>
    %142 = vector.shape_cast %141 : vector<1x32x8xbf16> to vector<32x8xbf16>
    %cst_99 = arith.constant dense<0.000000e+00> : vector<8x8xf32>
    %143 = tpu.matmul %5, %142, %cst_99 {dimension_numbers = #tpu.dot_dimension_numbers<[1], [0], [0], [1], [0, 0, 1, 1], [], []>} : vector<8x32xbf16>, vector<32x8xbf16>, vector<8x8xf32> -> vector<8x8xf32>
    %c3_100 = arith.constant 3 : index
    %c0_101 = arith.constant 0 : index
    %c0_102 = arith.constant 0 : index
    %144 = vector.load %arg6[%c3_100, %c0_101, %c0_102] : memref<4x1x8xf32, #tpu.memory_space<vmem>>, vector<1x1x8xf32>
    %145 = vector.shape_cast %144 : vector<1x1x8xf32> to vector<1x8xf32>
    %146 = vector.broadcast %145 : vector<1x8xf32> to vector<8x8xf32>
    %147 = arith.addf %143, %146 : vector<8x8xf32>
    %c3_103 = arith.constant 3 : index
    %c0_104 = arith.constant 0 : index
    %c0_105 = arith.constant 0 : index
    %148 = vector.load %arg7[%c3_103, %c0_104, %c0_105] : memref<4x32x8xbf16, #tpu.memory_space<vmem>>, vector<1x32x8xbf16>
    %149 = vector.shape_cast %148 : vector<1x32x8xbf16> to vector<32x8xbf16>
    %cst_106 = arith.constant dense<0.000000e+00> : vector<8x8xf32>
    %150 = tpu.matmul %6, %149, %cst_106 {dimension_numbers = #tpu.dot_dimension_numbers<[1], [0], [0], [1], [0, 0, 1, 1], [], []>} : vector<8x32xbf16>, vector<32x8xbf16>, vector<8x8xf32> -> vector<8x8xf32>
    %c3_107 = arith.constant 3 : index
    %c0_108 = arith.constant 0 : index
    %c0_109 = arith.constant 0 : index
    %151 = vector.load %arg8[%c3_107, %c0_108, %c0_109] : memref<4x1x8xf32, #tpu.memory_space<vmem>>, vector<1x1x8xf32>
    %152 = vector.shape_cast %151 : vector<1x1x8xf32> to vector<1x8xf32>
    %153 = vector.broadcast %152 : vector<1x8xf32> to vector<8x8xf32>
    %154 = arith.addf %150, %153 : vector<8x8xf32>
    %155 = arith.truncf %140 : vector<8x8xf32> to vector<8x8xbf16>
    %156 = arith.truncf %147 : vector<8x8xf32> to vector<8x8xbf16>
    "tpu.trace_start"() <{level = 10 : i32, message = "qd,kd->qk"}> : () -> ()
    %cst_110 = arith.constant dense<0.000000e+00> : vector<8x8xf32>
    %157 = tpu.matmul %155, %156, %cst_110 {dimension_numbers = #tpu.dot_dimension_numbers<[1], [1], [0], [0], [0, 0, 1, 0], [], []>} : vector<8x8xbf16>, vector<8x8xbf16>, vector<8x8xf32> -> vector<8x8xf32>
    "tpu.trace_stop"() : () -> ()
    %cst_111 = arith.constant dense<0xFF800000> : vector<8xf32>
    %158 = vector.multi_reduction <maximumf>, %157, %cst_111 [1] : vector<8x8xf32> to vector<8xf32>
    %159 = vector.shape_cast %158 : vector<8xf32> to vector<8x1xf32>
    %160 = vector.broadcast %159 : vector<8x1xf32> to vector<8x8xf32>
    %161 = arith.subf %157, %160 : vector<8x8xf32>
    %162 = math.exp %161 : vector<8x8xf32>
    %cst_112 = arith.constant dense<0.000000e+00> : vector<8xf32>
    %163 = vector.multi_reduction <add>, %162, %cst_112 [1] : vector<8x8xf32> to vector<8xf32>
    %164 = vector.shape_cast %163 : vector<8xf32> to vector<8x1xf32>
    %165 = arith.truncf %162 : vector<8x8xf32> to vector<8x8xbf16>
    %166 = arith.truncf %154 : vector<8x8xf32> to vector<8x8xbf16>
    %cst_113 = arith.constant dense<0.000000e+00> : vector<8x8xf32>
    %167 = tpu.matmul %165, %166, %cst_113 {dimension_numbers = #tpu.dot_dimension_numbers<[1], [0], [0], [1], [0, 0, 1, 1], [], []>} : vector<8x8xbf16>, vector<8x8xbf16>, vector<8x8xf32> -> vector<8x8xf32>
    %168 = tpu.reciprocal %164 {approx = true} : vector<8x1xf32> -> vector<8x1xf32>
    %169 = vector.broadcast %168 : vector<8x1xf32> to vector<8x8xf32>
    %170 = arith.mulf %167, %169 : vector<8x8xf32>
    %171 = arith.truncf %170 : vector<8x8xf32> to vector<8x8xbf16>
    %c3_114 = arith.constant 3 : index
    %c0_115 = arith.constant 0 : index
    %c0_116 = arith.constant 0 : index
    %172 = vector.load %arg9[%c3_114, %c0_115, %c0_116] : memref<4x8x32xbf16, #tpu.memory_space<vmem>>, vector<1x8x32xbf16>
    %173 = vector.shape_cast %172 : vector<1x8x32xbf16> to vector<8x32xbf16>
    %cst_117 = arith.constant dense<0.000000e+00> : vector<8x32xf32>
    %174 = tpu.matmul %171, %173, %cst_117 {dimension_numbers = #tpu.dot_dimension_numbers<[1], [0], [0], [1], [0, 0, 1, 1], [], []>} : vector<8x8xbf16>, vector<8x32xbf16>, vector<8x32xf32> -> vector<8x32xf32>
    %175 = arith.addf %133, %174 : vector<8x32xf32>
    %176 = arith.addf %1, %175 : vector<8x32xf32>
    %c0_118 = arith.constant 0 : index
    %c0_119 = arith.constant 0 : index
    %177 = vector.load %arg10[%c0_118, %c0_119] : memref<1x32xf32, #tpu.memory_space<vmem>>, vector<1x32xf32>
    %178 = vector.broadcast %177 : vector<1x32xf32> to vector<8x32xf32>
    %179 = arith.addf %176, %178 : vector<8x32xf32>
    %c0_120 = arith.constant 0 : index
    %c0_121 = arith.constant 0 : index
    %180 = vector.load %arg11[%c0_120, %c0_121] : memref<1x32xf32, #tpu.memory_space<vmem>>, vector<1x32xf32>
    %c0_122 = arith.constant 0 : index
    %c0_123 = arith.constant 0 : index
    %181 = vector.load %arg12[%c0_122, %c0_123] : memref<1x32xf32, #tpu.memory_space<vmem>>, vector<1x32xf32>
    %cst_124 = arith.constant dense<0.000000e+00> : vector<8xf32>
    %182 = vector.multi_reduction <add>, %179, %cst_124 [1] : vector<8x32xf32> to vector<8xf32>
    %183 = vector.shape_cast %182 : vector<8xf32> to vector<8x1xf32>
    %cst_125 = arith.constant 3.200000e+01 : f32
    %184 = vector.broadcast %cst_125 : f32 to vector<8x1xf32>
    %185 = arith.divf %183, %184 : vector<8x1xf32>
    %186 = vector.broadcast %185 : vector<8x1xf32> to vector<8x32xf32>
    %187 = arith.subf %179, %186 : vector<8x32xf32>
    %188 = vector.broadcast %185 : vector<8x1xf32> to vector<8x32xf32>
    %189 = arith.subf %179, %188 : vector<8x32xf32>
    %190 = arith.mulf %187, %189 : vector<8x32xf32>
    %cst_126 = arith.constant dense<0.000000e+00> : vector<8xf32>
    %191 = vector.multi_reduction <add>, %190, %cst_126 [1] : vector<8x32xf32> to vector<8xf32>
    %192 = vector.shape_cast %191 : vector<8xf32> to vector<8x1xf32>
    %cst_127 = arith.constant 3.200000e+01 : f32
    %193 = vector.broadcast %cst_127 : f32 to vector<8x1xf32>
    %194 = arith.divf %192, %193 : vector<8x1xf32>
    %195 = vector.broadcast %185 : vector<8x1xf32> to vector<8x32xf32>
    %196 = arith.subf %179, %195 : vector<8x32xf32>
    %cst_128 = arith.constant 9.99999974E-6 : f32
    %197 = vector.broadcast %cst_128 : f32 to vector<8x1xf32>
    %198 = arith.addf %194, %197 : vector<8x1xf32>
    %199 = math.rsqrt %198 : vector<8x1xf32>
    %200 = vector.broadcast %199 : vector<8x1xf32> to vector<8x32xf32>
    %201 = arith.mulf %196, %200 : vector<8x32xf32>
    %202 = vector.broadcast %180 : vector<1x32xf32> to vector<8x32xf32>
    %203 = arith.mulf %201, %202 : vector<8x32xf32>
    %204 = vector.broadcast %181 : vector<1x32xf32> to vector<8x32xf32>
    %205 = arith.addf %203, %204 : vector<8x32xf32>
    %c0_129 = arith.constant 0 : index
    %c0_130 = arith.constant 0 : index
    %c0_131 = arith.constant 0 : index
    %206 = vector.load %arg13[%c0_129, %c0_130, %c0_131] : memref<1x8x32xf32, #tpu.memory_space<vmem>>, vector<1x8x32xf32>
    %207 = vector.shape_cast %206 : vector<1x8x32xf32> to vector<8x32xf32>
    %208 = vector.shape_cast %205 : vector<8x32xf32> to vector<1x8x32xf32>
    tpu.vector_store %arg13[%c0_129, %c0_130, %c0_131], %208 {strides = array<i32>} : memref<1x8x32xf32, #tpu.memory_space<vmem>>, vector<1x8x32xf32>,
    return
  }
  func.func @transform_0(%arg0: i32) -> (i32, i32, i32) {
    %c0_i32 = arith.constant 0 : i32
    %c0_i32_0 = arith.constant 0 : i32
    %c0_i32_1 = arith.constant 0 : i32
    return %arg0, %c0_i32, %c0_i32_0 : i32, i32, i32
  }
  func.func @transform_1(%arg0: i32) -> (i32, i32, i32) {
    %c0_i32 = arith.constant 0 : i32
    %c0_i32_0 = arith.constant 0 : i32
    %c0_i32_1 = arith.constant 0 : i32
    return %arg0, %c0_i32, %c0_i32_0 : i32, i32, i32
  }
  func.func @transform_2(%arg0: i32) -> (i32, i32, i32) {
    %c0_i32 = arith.constant 0 : i32
    %c0_i32_0 = arith.constant 0 : i32
    %c0_i32_1 = arith.constant 0 : i32
    %c0_i32_2 = arith.constant 0 : i32
    return %c0_i32, %c0_i32_0, %c0_i32_1 : i32, i32, i32
  }
  func.func @transform_3(%arg0: i32) -> (i32, i32, i32) {
    %c0_i32 = arith.constant 0 : i32
    %c0_i32_0 = arith.constant 0 : i32
    %c0_i32_1 = arith.constant 0 : i32
    %c0_i32_2 = arith.constant 0 : i32
    return %c0_i32, %c0_i32_0, %c0_i32_1 : i32, i32, i32
  }
  func.func @transform_4(%arg0: i32) -> (i32, i32, i32) {
    %c0_i32 = arith.constant 0 : i32
    %c0_i32_0 = arith.constant 0 : i32
    %c0_i32_1 = arith.constant 0 : i32
    %c0_i32_2 = arith.constant 0 : i32
    return %c0_i32, %c0_i32_0, %c0_i32_1 : i32, i32, i32
  }
  func.func @transform_5(%arg0: i32) -> (i32, i32, i32) {
    %c0_i32 = arith.constant 0 : i32
    %c0_i32_0 = arith.constant 0 : i32
    %c0_i32_1 = arith.constant 0 : i32
    %c0_i32_2 = arith.constant 0 : i32
    return %c0_i32, %c0_i32_0, %c0_i32_1 : i32, i32, i32
  }
  func.func @transform_6(%arg0: i32) -> (i32, i32, i32) {
    %c0_i32 = arith.constant 0 : i32
    %c0_i32_0 = arith.constant 0 : i32
    %c0_i32_1 = arith.constant 0 : i32
    %c0_i32_2 = arith.constant 0 : i32
    return %c0_i32, %c0_i32_0, %c0_i32_1 : i32, i32, i32
  }
  func.func @transform_7(%arg0: i32) -> (i32, i32, i32) {
    %c0_i32 = arith.constant 0 : i32
    %c0_i32_0 = arith.constant 0 : i32
    %c0_i32_1 = arith.constant 0 : i32
    %c0_i32_2 = arith.constant 0 : i32
    return %c0_i32, %c0_i32_0, %c0_i32_1 : i32, i32, i32
  }
  func.func @transform_8(%arg0: i32) -> (i32, i32, i32) {
    %c0_i32 = arith.constant 0 : i32
    %c0_i32_0 = arith.constant 0 : i32
    %c0_i32_1 = arith.constant 0 : i32
    %c0_i32_2 = arith.constant 0 : i32
    return %c0_i32, %c0_i32_0, %c0_i32_1 : i32, i32, i32
  }
  func.func @transform_9(%arg0: i32) -> (i32, i32) {
    %c0_i32 = arith.constant 0 : i32
    %c0_i32_0 = arith.constant 0 : i32
    %c0_i32_1 = arith.constant 0 : i32
    return %c0_i32, %c0_i32_0 : i32, i32
  }
  func.func @transform_10(%arg0: i32) -> (i32, i32) {
    %c0_i32 = arith.constant 0 : i32
    %c0_i32_0 = arith.constant 0 : i32
    %c0_i32_1 = arith.constant 0 : i32
    return %c0_i32, %c0_i32_0 : i32, i32
  }
  func.func @transform_11(%arg0: i32) -> (i32, i32) {
    %c0_i32 = arith.constant 0 : i32
    %c0_i32_0 = arith.constant 0 : i32
    %c0_i32_1 = arith.constant 0 : i32
    return %c0_i32, %c0_i32_0 : i32, i32
  }
  func.func @transform_12(%arg0: i32) -> (i32, i32, i32) {
    %c0_i32 = arith.constant 0 : i32
    %c0_i32_0 = arith.constant 0 : i32
    %c0_i32_1 = arith.constant 0 : i32
    return %arg0, %c0_i32, %c0_i32_0 : i32, i32, i32
  }
}

</mosaic_0001>

<llo_original>
// kernel: tpu_custom_call.1
$region0: #{tpu_custom_call.1}
  #allocation0 [shape = 'u32[]', space=smem, size = 0x4, offset = 0x4, fixed_abs, tag = 'smem constant byte address 0x4 - core index']
  #allocation1 [shape = 'u32[144,128]{1,0:T(1,128)}', space=vmem, size = 0x12000, scoped, tag = 'internal scratch']
  %s0 = inlined_call_operand.vmem [shape: f32[2,8,32], index: 0, kind: input, shape index: {}]
  %s1 = inlined_call_operand.vmem [shape: f32[2,8,32], index: 1, kind: input, shape index: {}]
  %s2 = inlined_call_operand.vmem [shape: bf16[4,32,8], index: 2, kind: input, shape index: {}]
  %s3 = inlined_call_operand.vmem [shape: f32[4,1,8], index: 3, kind: input, shape index: {}]
  %s4 = inlined_call_operand.vmem [shape: bf16[4,32,8], index: 4, kind: input, shape index: {}]
  %s5 = inlined_call_operand.vmem [shape: f32[4,1,8], index: 5, kind: input, shape index: {}]
  %s6 = inlined_call_operand.vmem [shape: bf16[4,32,8], index: 6, kind: input, shape index: {}]
  %s7 = inlined_call_operand.vmem [shape: f32[4,1,8], index: 7, kind: input, shape index: {}]
  %s8 = inlined_call_operand.vmem [shape: bf16[4,8,32], index: 8, kind: input, shape index: {}]
  %s9 = inlined_call_operand.vmem [shape: f32[1,32], index: 9, kind: input, shape index: {}]
  %s10 = inlined_call_operand.vmem [shape: f32[1,32], index: 10, kind: input, shape index: {}]
  %s11 = inlined_call_operand.vmem [shape: f32[1,32], index: 11, kind: input, shape index: {}]
  %s12 = inlined_call_operand.hbm [shape: f32[2,8,32], index: 12, kind: output, shape index: {}]
  %s13 = sld [smem:[#allocation0]]
  $region81: #{tpu_custom_call.1} parent=0
    _
  %s15 = ssub.s32 1, %s13
  %s16 = scalar_select 0, %s15, %s13
  $region1: #{tpu_custom_call.1} parent=0
    #allocation2 [shape = 'u8[8192]{0}', space=vmem, size = 0x2000, scoped, tag = 'output window, operand 0']
    #allocation3 [shape = 's32[2]{0}', space=sflag, size = 0x8, scoped, tag = 'scoped memory for tpu_custom_call.1']
    %17 = vsyncpa [#allocation3], 0
    %s18 = scalar_lea.sflag [#allocation3], 1
    %19 = vsyncpa %s18, 0
    loop: start=0, step=1, limit=4
    $region2: #{tpu_custom_call.1} parent=1 // loop_pre_header
      _
    $region3: #{tpu_custom_call.1} parent=1 // loop_header
      %s21 = sphi 0, %s25
      %p22 = scmp.ge.s32.totalorder %s21, 4
      %s31 = sphi 0, %s33
      %s34 = sphi 0, %s31
      %s35 = sphi 0, %s34
      %s51 = sphi 0, %s35
      %s57 = sphi 0, %s59
      %s60 = sphi 0, %s57
      %s61 = sphi 0, %s60
      %s77 = sphi 0, %s61
      %s81 = sphi 0, %s81
      %s83 = sphi 0, %s81
      %s84 = sphi 0, %s83
      %s98 = sphi 0, %s84
      %s102 = sphi 0, %s102
      %s104 = sphi 0, %s102
      %s105 = sphi 0, %s104
      %s119 = sphi 0, %s105
      %s123 = sphi 0, %s123
      %s125 = sphi 0, %s123
      %s126 = sphi 0, %s125
      %s140 = sphi 0, %s126
      %s144 = sphi 0, %s144
      %s146 = sphi 0, %s144
      %s147 = sphi 0, %s146
      %s161 = sphi 0, %s147
      %s165 = sphi 0, %s165
      %s167 = sphi 0, %s165
      %s168 = sphi 0, %s167
      %s182 = sphi 0, %s168
      %s186 = sphi 0, %s186
      %s188 = sphi 0, %s186
      %s189 = sphi 0, %s188
      %s203 = sphi 0, %s189
      %s207 = sphi 0, %s207
      %s209 = sphi 0, %s207
      %s210 = sphi 0, %s209
      %s224 = sphi 0, %s210
      %s228 = sphi 0, %s228
      %s230 = sphi 0, %s228
      %s231 = sphi 0, %s230
      %s245 = sphi 0, %s231
      %s249 = sphi 0, %s249
      %s251 = sphi 0, %s249
      %s252 = sphi 0, %s251
      %s266 = sphi 0, %s252
      %s270 = sphi 0, %s270
      %s272 = sphi 0, %s270
      %s273 = sphi 0, %s272
      %s287 = sphi 0, %s273
      %s293 = sphi 0, %s295
      %s296 = sphi 0, %s293
      %s297 = sphi 0, %s296
      %s313 = sphi 0, %s297
    $region4: #{tpu_custom_call.1} parent=1 // loop_header_branch
      %24 = sbr.rel (%p22) target = $region8
    $region5: #{tpu_custom_call.1} parent=1 // loop_body
      %s26 = ssub.s32 %s21, 1
      %s27 = ssub.s32 %s21, 2
      %s28 = sadd.s32 %s21, 1
      %s29 = ssub.s32 %s21, %s28
      %p30 = scmp.eq.s32.totalorder %s29, 0
      %s32 = sadd.s32 %s31, 1
      %s33 = scalar_select %p30, %s31, %s32
      %p36 = pneg %p30
      %p37 = scmp.eq.s32.totalorder %s21, 1
      %p38 = por %p36, %p37
      %p39 = scmp.ne.s32.totalorder %s31, %s34
      %p40 = scmp.eq.s32.totalorder %s21, 0
      %p41 = por %p39, %p40
      %p42 = scmp.ne.s32.totalorder %s31, %s34
      %p43 = scmp.eq.s32.totalorder %s26, 1
      %p44 = por %p42, %p43
      %p45 = scmp.ne.s32.totalorder %s34, %s35
      %p46 = scmp.eq.s32.totalorder %s26, 0
      %p47 = por %p45, %p46
      %p48 = scmp.ne.s32.totalorder %s34, %s35
      %p49 = scmp.eq.s32.totalorder %s27, 1
      %p50 = por %p48, %p49
      %p52 = scmp.ne.s32.totalorder %s35, %s51
      %p53 = scmp.eq.s32.totalorder %s27, 0
      %p54 = por %p52, %p53
      %s55 = ssub.s32 %s21, %s28
      %p56 = scmp.eq.s32.totalorder %s55, 0
      %s58 = sadd.s32 %s57, 1
      %s59 = scalar_select %p56, %s57, %s58
      %p62 = pneg %p56
      %p63 = scmp.eq.s32.totalorder %s21, 1
      %p64 = por %p62, %p63
      %p65 = scmp.ne.s32.totalorder %s57, %s60
      %p66 = scmp.eq.s32.totalorder %s21, 0
      %p67 = por %p65, %p66
      %p68 = scmp.ne.s32.totalorder %s57, %s60
      %p69 = scmp.eq.s32.totalorder %s26, 1
      %p70 = por %p68, %p69
      %p71 = scmp.ne.s32.totalorder %s60, %s61
      %p72 = scmp.eq.s32.totalorder %s26, 0
      %p73 = por %p71, %p72
      %p74 = scmp.ne.s32.totalorder %s60, %s61
      %p75 = scmp.eq.s32.totalorder %s27, 1
      %p76 = por %p74, %p75
      %p78 = scmp.ne.s32.totalorder %s61, %s77
      %p79 = scmp.eq.s32.totalorder %s27, 0
      %p80 = por %p78, %p79
      %s82 = sadd.s32 %s81, 1
      %p85 = scmp.eq.s32.totalorder %s21, 1
      %p86 = scmp.ne.s32.totalorder %s81, %s83
      %p87 = scmp.eq.s32.totalorder %s21, 0
      %p88 = por %p86, %p87
      %p89 = scmp.ne.s32.totalorder %s81, %s83
      %p90 = scmp.eq.s32.totalorder %s26, 1
      %p91 = por %p89, %p90
      %p92 = scmp.ne.s32.totalorder %s83, %s84
      %p93 = scmp.eq.s32.totalorder %s26, 0
      %p94 = por %p92, %p93
      %p95 = scmp.ne.s32.totalorder %s83, %s84
      %p96 = scmp.eq.s32.totalorder %s27, 1
      %p97 = por %p95, %p96
      %p99 = scmp.ne.s32.totalorder %s84, %s98
      %p100 = scmp.eq.s32.totalorder %s27, 0
      %p101 = por %p99, %p100
      %s103 = sadd.s32 %s102, 1
      %p106 = scmp.eq.s32.totalorder %s21, 1
      %p107 = scmp.ne.s32.totalorder %s102, %s104
      %p108 = scmp.eq.s32.totalorder %s21, 0
      %p109 = por %p107, %p108
      %p110 = scmp.ne.s32.totalorder %s102, %s104
      %p111 = scmp.eq.s32.totalorder %s26, 1
      %p112 = por %p110, %p111
      %p113 = scmp.ne.s32.totalorder %s104, %s105
      %p114 = scmp.eq.s32.totalorder %s26, 0
      %p115 = por %p113, %p114
      %p116 = scmp.ne.s32.totalorder %s104, %s105
      %p117 = scmp.eq.s32.totalorder %s27, 1
      %p118 = por %p116, %p117
      %p120 = scmp.ne.s32.totalorder %s105, %s119
      %p121 = scmp.eq.s32.totalorder %s27, 0
      %p122 = por %p120, %p121
      %s124 = sadd.s32 %s123, 1
      %p127 = scmp.eq.s32.totalorder %s21, 1
      %p128 = scmp.ne.s32.totalorder %s123, %s125
      %p129 = scmp.eq.s32.totalorder %s21, 0
      %p130 = por %p128, %p129
      %p131 = scmp.ne.s32.totalorder %s123, %s125
      %p132 = scmp.eq.s32.totalorder %s26, 1
      %p133 = por %p131, %p132
      %p134 = scmp.ne.s32.totalorder %s125, %s126
      %p135 = scmp.eq.s32.totalorder %s26, 0
      %p136 = por %p134, %p135
      %p137 = scmp.ne.s32.totalorder %s125, %s126
      %p138 = scmp.eq.s32.totalorder %s27, 1
      %p139 = por %p137, %p138
      %p141 = scmp.ne.s32.totalorder %s126, %s140
      %p142 = scmp.eq.s32.totalorder %s27, 0
      %p143 = por %p141, %p142
      %s145 = sadd.s32 %s144, 1
      %p148 = scmp.eq.s32.totalorder %s21, 1
      %p149 = scmp.ne.s32.totalorder %s144, %s146
      %p150 = scmp.eq.s32.totalorder %s21, 0
      %p151 = por %p149, %p150
      %p152 = scmp.ne.s32.totalorder %s144, %s146
      %p153 = scmp.eq.s32.totalorder %s26, 1
      %p154 = por %p152, %p153
      %p155 = scmp.ne.s32.totalorder %s146, %s147
      %p156 = scmp.eq.s32.totalorder %s26, 0
      %p157 = por %p155, %p156
      %p158 = scmp.ne.s32.totalorder %s146, %s147
      %p159 = scmp.eq.s32.totalorder %s27, 1
      %p160 = por %p158, %p159
      %p162 = scmp.ne.s32.totalorder %s147, %s161
      %p163 = scmp.eq.s32.totalorder %s27, 0
      %p164 = por %p162, %p163
      %s166 = sadd.s32 %s165, 1
      %p169 = scmp.eq.s32.totalorder %s21, 1
      %p170 = scmp.ne.s32.totalorder %s165, %s167
      %p171 = scmp.eq.s32.totalorder %s21, 0
      %p172 = por %p170, %p171
      %p173 = scmp.ne.s32.totalorder %s165, %s167
      %p174 = scmp.eq.s32.totalorder %s26, 1
      %p175 = por %p173, %p174
      %p176 = scmp.ne.s32.totalorder %s167, %s168
      %p177 = scmp.eq.s32.totalorder %s26, 0
      %p178 = por %p176, %p177
      %p179 = scmp.ne.s32.totalorder %s167, %s168
      %p180 = scmp.eq.s32.totalorder %s27, 1
      %p181 = por %p179, %p180
      %p183 = scmp.ne.s32.totalorder %s168, %s182
      %p184 = scmp.eq.s32.totalorder %s27, 0
      %p185 = por %p183, %p184
      %s187 = sadd.s32 %s186, 1
      %p190 = scmp.eq.s32.totalorder %s21, 1
      %p191 = scmp.ne.s32.totalorder %s186, %s188
      %p192 = scmp.eq.s32.totalorder %s21, 0
      %p193 = por %p191, %p192
      %p194 = scmp.ne.s32.totalorder %s186, %s188
      %p195 = scmp.eq.s32.totalorder %s26, 1
      %p196 = por %p194, %p195
      %p197 = scmp.ne.s32.totalorder %s188, %s189
      %p198 = scmp.eq.s32.totalorder %s26, 0
      %p199 = por %p197, %p198
      %p200 = scmp.ne.s32.totalorder %s188, %s189
      %p201 = scmp.eq.s32.totalorder %s27, 1
      %p202 = por %p200, %p201
      %p204 = scmp.ne.s32.totalorder %s189, %s203
      %p205 = scmp.eq.s32.totalorder %s27, 0
      %p206 = por %p204, %p205
      %s208 = sadd.s32 %s207, 1
      %p211 = scmp.eq.s32.totalorder %s21, 1
      %p212 = scmp.ne.s32.totalorder %s207, %s209
      %p213 = scmp.eq.s32.totalorder %s21, 0
      %p214 = por %p212, %p213
      %p215 = scmp.ne.s32.totalorder %s207, %s209
      %p216 = scmp.eq.s32.totalorder %s26, 1
      %p217 = por %p215, %p216
      %p218 = scmp.ne.s32.totalorder %s209, %s210
      %p219 = scmp.eq.s32.totalorder %s26, 0
      %p220 = por %p218, %p219
      %p221 = scmp.ne.s32.totalorder %s209, %s210
      %p222 = scmp.eq.s32.totalorder %s27, 1
      %p223 = por %p221, %p222
      %p225 = scmp.ne.s32.totalorder %s210, %s224
      %p226 = scmp.eq.s32.totalorder %s27, 0
      %p227 = por %p225, %p226
      %s229 = sadd.s32 %s228, 1
      %p232 = scmp.eq.s32.totalorder %s21, 1
      %p233 = scmp.ne.s32.totalorder %s228, %s230
      %p234 = scmp.eq.s32.totalorder %s21, 0
      %p235 = por %p233, %p234
      %p236 = scmp.ne.s32.totalorder %s228, %s230
      %p237 = scmp.eq.s32.totalorder %s26, 1
      %p238 = por %p236, %p237
      %p239 = scmp.ne.s32.totalorder %s230, %s231
      %p240 = scmp.eq.s32.totalorder %s26, 0
      %p241 = por %p239, %p240
      %p242 = scmp.ne.s32.totalorder %s230, %s231
      %p243 = scmp.eq.s32.totalorder %s27, 1
      %p244 = por %p242, %p243
      %p246 = scmp.ne.s32.totalorder %s231, %s245
      %p247 = scmp.eq.s32.totalorder %s27, 0
      %p248 = por %p246, %p247
      %s250 = sadd.s32 %s249, 1
      %p253 = scmp.eq.s32.totalorder %s21, 1
      %p254 = scmp.ne.s32.totalorder %s249, %s251
      %p255 = scmp.eq.s32.totalorder %s21, 0
      %p256 = por %p254, %p255
      %p257 = scmp.ne.s32.totalorder %s249, %s251
      %p258 = scmp.eq.s32.totalorder %s26, 1
      %p259 = por %p257, %p258
      %p260 = scmp.ne.s32.totalorder %s251, %s252
      %p261 = scmp.eq.s32.totalorder %s26, 0
      %p262 = por %p260, %p261
      %p263 = scmp.ne.s32.totalorder %s251, %s252
      %p264 = scmp.eq.s32.totalorder %s27, 1
      %p265 = por %p263, %p264
      %p267 = scmp.ne.s32.totalorder %s252, %s266
      %p268 = scmp.eq.s32.totalorder %s27, 0
      %p269 = por %p267, %p268
      %s271 = sadd.s32 %s270, 1
      %p274 = scmp.eq.s32.totalorder %s21, 1
      %p275 = scmp.ne.s32.totalorder %s270, %s272
      %p276 = scmp.eq.s32.totalorder %s21, 0
      %p277 = por %p275, %p276
      %p278 = scmp.ne.s32.totalorder %s270, %s272
      %p279 = scmp.eq.s32.totalorder %s26, 1
      %p280 = por %p278, %p279
      %p281 = scmp.ne.s32.totalorder %s272, %s273
      %p282 = scmp.eq.s32.totalorder %s26, 0
      %p283 = por %p281, %p282
      %p284 = scmp.ne.s32.totalorder %s272, %s273
      %p285 = scmp.eq.s32.totalorder %s27, 1
      %p286 = por %p284, %p285
      %p288 = scmp.ne.s32.totalorder %s273, %s287
      %p289 = scmp.eq.s32.totalorder %s27, 0
      %p290 = por %p288, %p289
      %s291 = ssub.s32 %s21, %s28
      %p292 = scmp.eq.s32.totalorder %s291, 0
      %s294 = sadd.s32 %s293, 1
      %s295 = scalar_select %p292, %s293, %s294
      %p298 = pneg %p292
      %p299 = scmp.eq.s32.totalorder %s21, 1
      %p300 = por %p298, %p299
      %p301 = scmp.ne.s32.totalorder %s293, %s296
      %p302 = scmp.eq.s32.totalorder %s21, 0
      %p303 = por %p301, %p302
      %p304 = scmp.ne.s32.totalorder %s293, %s296
      %p305 = scmp.eq.s32.totalorder %s26, 1
      %p306 = por %p304, %p305
      %p307 = scmp.ne.s32.totalorder %s296, %s297
      %p308 = scmp.eq.s32.totalorder %s26, 0
      %p309 = por %p307, %p308
      %p310 = scmp.ne.s32.totalorder %s296, %s297
      %p311 = scmp.eq.s32.totalorder %s27, 1
      %p312 = por %p310, %p311
      %p314 = scmp.ne.s32.totalorder %s297, %s313
      %p315 = scmp.eq.s32.totalorder %s27, 0
      %p316 = por %p314, %p315
      %p317 = scmp.le.s32.totalorder 1, %s21
      %p318 = scmp.lt.s32.totalorder %s21, 3
      %p319 = pnand %p317, %p318
      %p320 = pneg %p319
      // Predicated region
      $region9: #{tpu_custom_call.1} parent=5 // pred_check
        _
      $region10: #{tpu_custom_call.1} parent=5 // pred_check_branch
        %322 = sbr.rel (%p319) target = $region12
      $region11: #{tpu_custom_call.1} parent=5 // pred_region
        %s323 = ssub.s32 %s21, 1
        // Predicated region
        $region13: #{tpu_custom_call.1} parent=11 // pred_check
          %p324 = pneg %p94
        $region14: #{tpu_custom_call.1} parent=11 // pred_check_branch
          %326 = sbr.rel (%p324) target = $region16
        $region15: #{tpu_custom_call.1} parent=11 // pred_region
          _
        $region16: #{tpu_custom_call.1} parent=11 // pred_fallthru
          _
        // Predicated region
        $region17: #{tpu_custom_call.1} parent=11 // pred_check
          %p327 = pneg %p115
        $region18: #{tpu_custom_call.1} parent=11 // pred_check_branch
          %329 = sbr.rel (%p327) target = $region20
        $region19: #{tpu_custom_call.1} parent=11 // pred_region
          _
        $region20: #{tpu_custom_call.1} parent=11 // pred_fallthru
          _
        // Predicated region
        $region21: #{tpu_custom_call.1} parent=11 // pred_check
          %p330 = pneg %p136
        $region22: #{tpu_custom_call.1} parent=11 // pred_check_branch
          %332 = sbr.rel (%p330) target = $region24
        $region23: #{tpu_custom_call.1} parent=11 // pred_region
          _
        $region24: #{tpu_custom_call.1} parent=11 // pred_fallthru
          _
        // Predicated region
        $region25: #{tpu_custom_call.1} parent=11 // pred_check
          %p333 = pneg %p157
        $region26: #{tpu_custom_call.1} parent=11 // pred_check_branch
          %335 = sbr.rel (%p333) target = $region28
        $region27: #{tpu_custom_call.1} parent=11 // pred_region
          _
        $region28: #{tpu_custom_call.1} parent=11 // pred_fallthru
          _
        // Predicated region
        $region29: #{tpu_custom_call.1} parent=11 // pred_check
          %p336 = pneg %p178
        $region30: #{tpu_custom_call.1} parent=11 // pred_check_branch
          %338 = sbr.rel (%p336) target = $region32
        $region31: #{tpu_custom_call.1} parent=11 // pred_region
          _
        $region32: #{tpu_custom_call.1} parent=11 // pred_fallthru
          _
        // Predicated region
        $region33: #{tpu_custom_call.1} parent=11 // pred_check
          %p339 = pneg %p199
        $region34: #{tpu_custom_call.1} parent=11 // pred_check_branch
          %341 = sbr.rel (%p339) target = $region36
        $region35: #{tpu_custom_call.1} parent=11 // pred_region
          _
        $region36: #{tpu_custom_call.1} parent=11 // pred_fallthru
          _
        // Predicated region
        $region37: #{tpu_custom_call.1} parent=11 // pred_check
          %p342 = pneg %p220
        $region38: #{tpu_custom_call.1} parent=11 // pred_check_branch
          %344 = sbr.rel (%p342) target = $region40
        $region39: #{tpu_custom_call.1} parent=11 // pred_region
          _
        $region40: #{tpu_custom_call.1} parent=11 // pred_fallthru
          _
        // Predicated region
        $region41: #{tpu_custom_call.1} parent=11 // pred_check
          %p345 = pneg %p241
        $region42: #{tpu_custom_call.1} parent=11 // pred_check_branch
          %347 = sbr.rel (%p345) target = $region44
        $region43: #{tpu_custom_call.1} parent=11 // pred_region
          _
        $region44: #{tpu_custom_call.1} parent=11 // pred_fallthru
          _
        // Predicated region
        $region45: #{tpu_custom_call.1} parent=11 // pred_check
          %p348 = pneg %p262
        $region46: #{tpu_custom_call.1} parent=11 // pred_check_branch
          %350 = sbr.rel (%p348) target = $region48
        $region47: #{tpu_custom_call.1} parent=11 // pred_region
          _
        $region48: #{tpu_custom_call.1} parent=11 // pred_fallthru
          _
        // Predicated region
        $region49: #{tpu_custom_call.1} parent=11 // pred_check
          %p351 = pneg %p283
        $region50: #{tpu_custom_call.1} parent=11 // pred_check_branch
          %353 = sbr.rel (%p351) target = $region52
        $region51: #{tpu_custom_call.1} parent=11 // pred_region
          _
        $region52: #{tpu_custom_call.1} parent=11 // pred_fallthru
          _
      $region12: #{tpu_custom_call.1} parent=5 // pred_fallthru
        _
      %p354 = scmp.lt.s32.totalorder %s21, 2
      // Predicated region
      $region53: #{tpu_custom_call.1} parent=5 // pred_check
        %p355 = pneg %p354
      $region54: #{tpu_custom_call.1} parent=5 // pred_check_branch
        %357 = sbr.rel (%p355) target = $region56
      $region55: #{tpu_custom_call.1} parent=5 // pred_region
        // Predicated region
        $region57: #{tpu_custom_call.1} parent=55 // pred_check
          %p358 = pneg %p41
        $region58: #{tpu_custom_call.1} parent=55 // pred_check_branch
          %360 = sbr.rel (%p358) target = $region60
        $region59: #{tpu_custom_call.1} parent=55 // pred_region
          %p361 = scmp.lt.s32.totalorder %s21, 1
          %s362 = scalar_select %p361, %s21, 1
          %s363 = smul.addr %s362, 8
          %s364 = scalar_lea.vmem %s0, %s363
        $region60: #{tpu_custom_call.1} parent=55 // pred_fallthru
          _
        // Predicated region
        $region61: #{tpu_custom_call.1} parent=55 // pred_check
          %p365 = pneg %p67
        $region62: #{tpu_custom_call.1} parent=55 // pred_check_branch
          %367 = sbr.rel (%p365) target = $region64
        $region63: #{tpu_custom_call.1} parent=55 // pred_region
          %p368 = scmp.lt.s32.totalorder %s21, 1
          %s369 = scalar_select %p368, %s21, 1
          %s370 = smul.addr %s369, 8
          %s371 = scalar_lea.vmem %s1, %s370
        $region64: #{tpu_custom_call.1} parent=55 // pred_fallthru
          _
      $region56: #{tpu_custom_call.1} parent=5 // pred_fallthru
        _
      %p372 = scmp.le.s32.totalorder 1, %s21
      %p373 = scmp.lt.s32.totalorder %s21, 3
      %p374 = pnand %p372, %p373
      %p375 = pneg %p374
      // Predicated region
      $region65: #{tpu_custom_call.1} parent=5 // pred_check
        _
      $region66: #{tpu_custom_call.1} parent=5 // pred_check_branch
        %377 = sbr.rel (%p374) target = $region68
      $region67: #{tpu_custom_call.1} parent=5 // pred_region
        %s378 = ssub.s32 %s21, 1
        %p379 = scmp.lt.s32.totalorder %s26, 1
        %s380 = scalar_select %p379, %s26, 1
        %s381 = smul.addr %s380, 8
        %s382 = scalar_lea.vmem %s0, %s381
        %p383 = pneg %p47
        %p384 = pneg %p44
        %p385 = scmp.lt.s32.totalorder %s26, 1
        %s386 = scalar_select %p385, %s26, 1
        %s387 = smul.addr %s386, 8
        %s388 = scalar_lea.vmem %s1, %s387
        %p389 = pneg %p73
        %p390 = pneg %p70
        %p391 = pneg %p94
        %p392 = pneg %p91
        %p393 = pneg %p115
        %p394 = pneg %p112
        %p395 = pneg %p136
        %p396 = pneg %p133
        %p397 = pneg %p157
        %p398 = pneg %p154
        %p399 = pneg %p178
        %p400 = pneg %p175
        %p401 = pneg %p199
        %p402 = pneg %p196
        %p403 = pneg %p220
        %p404 = pneg %p217
        %p405 = pneg %p241
        %p406 = pneg %p238
        %p407 = pneg %p262
        %p408 = pneg %p259
        %p409 = pneg %p283
        %p410 = pneg %p280
        %p411 = pneg %p309
        %p412 = pneg %p306
        %s413 = sand.u32 %s296, 1
        %s414 = scalar_lea.sflag [#allocation3], %s413
        %s415 = sand.u32 %s296, 1
        %s416 = smul.addr %s415, 8
        %s417 = scalar_lea.vmem [#allocation2], %s416
        %p418 = scmp.lt.s32.totalorder %s26, 1
        %s419 = scalar_select %p418, %s26, 1
        %s420 = smul.addr %s419, 8
        %s421 = scalar_lea.vmem %s0, %s420
        %p422 = scmp.lt.s32.totalorder %s26, 1
        %s423 = scalar_select %p422, %s26, 1
        %s424 = smul.addr %s423, 8
        %s425 = scalar_lea.vmem %s1, %s424
        %v427 = vld [vmem:[%s421] sm:$0xff]
        %v428 = vld [vmem:[%s425] sm:$0xff]
        %v429 = vadd.f32 %v427, %v428
        %v430 = vpack.c.bf16 %v429, %v429
        %v431 = vpack.c.bf16 %v427, %v427
        %v432 = vld [vmem:[%s2] sm:$0xf]
        %v433 = vld [vmem:[%s2 + $0x4] sm:$0xf]
        %v434 = vld [vmem:[%s2 + $0x8] sm:$0xf]
        %v435 = vld [vmem:[%s2 + $0xc] sm:$0xf]
        %v436 = vld [vmem:[%s3] sm:$0x1]
        %v438 = vlaneseq
        %v439 = vshrl.u32 %v438, 7
        %v440 = vsub.s32 0, %v439
        %v441 = vrot.slane %v436, %v440
        %v447 = vunpack.c.l.b16 %v432
        %v448 = vunpack.c.l.b16 %v433
        %v449 = vunpack.c.l.b16 %v434
        %v450 = vunpack.c.l.b16 %v435
        %v451 = vpack.c.b16 %v448, %v447
        %v452 = vpack.c.b16 %v450, %v449
        %vm455 = vcmask 261120
        %v457 = vsel %vm455, %v430, 0
        %459 = vmatprep.subr.bf16.mxu0 0
        %460 = vmatpush1.bf16.msra.mxu0 %v451
        %461 = vmatprep.subr.bf16.mxu0 0
        %462 = vmatpush1.bf16.msra.mxu0 %v452
        %463 = vmatprep.subr.bf16.mxu0 0
        %464 = vmatpush1.bf16.msra.mxu0 0
        %465 = vmatprep.subr.bf16.mxu0 0
        %466 = vmatpush1.bf16.msra.mxu0 0
        %467 = vmatprep.subr.bf16.mxu0 0
        %468 = vmatpush1.bf16.msra.mxu0 0
        %469 = vmatprep.subr.bf16.mxu0 0
        %470 = vmatpush1.bf16.msra.mxu0 0
        %471 = vmatprep.subr.bf16.mxu0 0
        %472 = vmatpush1.bf16.msra.mxu0 0
        %473 = vmatprep.subr.bf16.mxu0 0
        %474 = vmatpush1.bf16.msra.mxu0 0
        %475 = vmatprep.subr.bf16.mxu0 0
        %476 = vmatpush1.bf16.msra.mxu0 0
        %477 = vmatprep.subr.bf16.mxu0 0
        %478 = vmatpush1.bf16.msra.mxu0 0
        %479 = vmatprep.subr.bf16.mxu0 0
        %480 = vmatpush1.bf16.msra.mxu0 0
        %481 = vmatprep.subr.bf16.mxu0 0
        %482 = vmatpush1.bf16.msra.mxu0 0
        %483 = vmatprep.subr.bf16.mxu0 0
        %484 = vmatpush1.bf16.msra.mxu0 0
        %485 = vmatprep.subr.bf16.mxu0 0
        %486 = vmatpush1.bf16.msra.mxu0 0
        %487 = vmatprep.subr.bf16.mxu0 0
        %488 = vmatpush1.bf16.msra.mxu0 0
        %489 = vmatprep.subr.bf16.mxu0 0
        %490 = vmatpush1.bf16.msra.mxu0 0
        %491 = vmatprep.mubr.bf16.mxu0 0
        %492 = vmatmul.mubr.bf16.gmra.mrb[0].mxu0 %v457
        %v493 = vpop.f32.mrb[0].mxu0
        %v494 = vadd.f32 %v441, %v493
        %v495 = vpop.f32.mrb[0].mxu0
        %v496 = vpop.f32.mrb[0].mxu0
        %v497 = vpop.f32.mrb[0].mxu0
        %498 = vdwg.mxu0
        %v499 = vld [vmem:[%s4] sm:$0xf]
        %v500 = vld [vmem:[%s4 + $0x4] sm:$0xf]
        %v501 = vld [vmem:[%s4 + $0x8] sm:$0xf]
        %v502 = vld [vmem:[%s4 + $0xc] sm:$0xf]
        %v503 = vld [vmem:[%s5] sm:$0x1]
        %v505 = vlaneseq
        %v506 = vshrl.u32 %v505, 7
        %v507 = vsub.s32 0, %v506
        %v508 = vrot.slane %v503, %v507
        %v514 = vunpack.c.l.b16 %v499
        %v515 = vunpack.c.l.b16 %v500
        %v516 = vunpack.c.l.b16 %v501
        %v517 = vunpack.c.l.b16 %v502
        %v518 = vpack.c.b16 %v515, %v514
        %v519 = vpack.c.b16 %v517, %v516
        %522 = vmatprep.subr.bf16.mxu0 0
        %523 = vmatpush1.bf16.msra.mxu0 %v518
        %524 = vmatprep.subr.bf16.mxu0 0
        %525 = vmatpush1.bf16.msra.mxu0 %v519
        %526 = vmatprep.subr.bf16.mxu0 0
        %527 = vmatpush1.bf16.msra.mxu0 0
        %528 = vmatprep.subr.bf16.mxu0 0
        %529 = vmatpush1.bf16.msra.mxu0 0
        %530 = vmatprep.subr.bf16.mxu0 0
        %531 = vmatpush1.bf16.msra.mxu0 0
        %532 = vmatprep.subr.bf16.mxu0 0
        %533 = vmatpush1.bf16.msra.mxu0 0
        %534 = vmatprep.subr.bf16.mxu0 0
        %535 = vmatpush1.bf16.msra.mxu0 0
        %536 = vmatprep.subr.bf16.mxu0 0
        %537 = vmatpush1.bf16.msra.mxu0 0
        %538 = vmatprep.subr.bf16.mxu0 0
        %539 = vmatpush1.bf16.msra.mxu0 0
        %540 = vmatprep.subr.bf16.mxu0 0
        %541 = vmatpush1.bf16.msra.mxu0 0
        %542 = vmatprep.subr.bf16.mxu0 0
        %543 = vmatpush1.bf16.msra.mxu0 0
        %544 = vmatprep.subr.bf16.mxu0 0
        %545 = vmatpush1.bf16.msra.mxu0 0
        %546 = vmatprep.subr.bf16.mxu0 0
        %547 = vmatpush1.bf16.msra.mxu0 0
        %548 = vmatprep.subr.bf16.mxu0 0
        %549 = vmatpush1.bf16.msra.mxu0 0
        %550 = vmatprep.subr.bf16.mxu0 0
        %551 = vmatpush1.bf16.msra.mxu0 0
        %552 = vmatprep.subr.bf16.mxu0 0
        %553 = vmatpush1.bf16.msra.mxu0 0
        %554 = vmatprep.mubr.bf16.mxu0 0
        %555 = vmatmul.mubr.bf16.gmra.mrb[0].mxu0 %v457
        %v556 = vpop.f32.mrb[0].mxu0
        %v557 = vadd.f32 %v508, %v556
        %v558 = vpop.f32.mrb[0].mxu0
        %v559 = vpop.f32.mrb[0].mxu0
        %v560 = vpop.f32.mrb[0].mxu0
        %561 = vdwg.mxu0
        %v562 = vld [vmem:[%s6] sm:$0xf]
        %v563 = vld [vmem:[%s6 + $0x4] sm:$0xf]
        %v564 = vld [vmem:[%s6 + $0x8] sm:$0xf]
        %v565 = vld [vmem:[%s6 + $0xc] sm:$0xf]
        %v566 = vld [vmem:[%s7] sm:$0x1]
        %v568 = vlaneseq
        %v569 = vshrl.u32 %v568, 7
        %v570 = vsub.s32 0, %v569
        %v571 = vrot.slane %v566, %v570
        %v577 = vunpack.c.l.b16 %v562
        %v578 = vunpack.c.l.b16 %v563
        %v579 = vunpack.c.l.b16 %v564
        %v580 = vunpack.c.l.b16 %v565
        %v581 = vpack.c.b16 %v578, %v577
        %v582 = vpack.c.b16 %v580, %v579
        %v586 = vsel %vm455, %v431, 0
        %588 = vmatprep.subr.bf16.mxu0 0
        %589 = vmatpush1.bf16.msra.mxu0 %v581
        %590 = vmatprep.subr.bf16.mxu0 0
        %591 = vmatpush1.bf16.msra.mxu0 %v582
        %592 = vmatprep.subr.bf16.mxu0 0
        %593 = vmatpush1.bf16.msra.mxu0 0
        %594 = vmatprep.subr.bf16.mxu0 0
        %595 = vmatpush1.bf16.msra.mxu0 0
        %596 = vmatprep.subr.bf16.mxu0 0
        %597 = vmatpush1.bf16.msra.mxu0 0
        %598 = vmatprep.subr.bf16.mxu0 0
        %599 = vmatpush1.bf16.msra.mxu0 0
        %600 = vmatprep.subr.bf16.mxu0 0
        %601 = vmatpush1.bf16.msra.mxu0 0
        %602 = vmatprep.subr.bf16.mxu0 0
        %603 = vmatpush1.bf16.msra.mxu0 0
        %604 = vmatprep.subr.bf16.mxu0 0
        %605 = vmatpush1.bf16.msra.mxu0 0
        %606 = vmatprep.subr.bf16.mxu0 0
        %607 = vmatpush1.bf16.msra.mxu0 0
        %608 = vmatprep.subr.bf16.mxu0 0
        %609 = vmatpush1.bf16.msra.mxu0 0
        %610 = vmatprep.subr.bf16.mxu0 0
        %611 = vmatpush1.bf16.msra.mxu0 0
        %612 = vmatprep.subr.bf16.mxu0 0
        %613 = vmatpush1.bf16.msra.mxu0 0
        %614 = vmatprep.subr.bf16.mxu0 0
        %615 = vmatpush1.bf16.msra.mxu0 0
        %616 = vmatprep.subr.bf16.mxu0 0
        %617 = vmatpush1.bf16.msra.mxu0 0
        %618 = vmatprep.subr.bf16.mxu0 0
        %619 = vmatpush1.bf16.msra.mxu0 0
        %620 = vmatprep.mubr.bf16.mxu0 0
        %621 = vmatmul.mubr.bf16.gmra.mrb[0].mxu0 %v586
        %v622 = vpop.f32.mrb[0].mxu0
        %v623 = vadd.f32 %v571, %v622
        %v624 = vpop.f32.mrb[0].mxu0
        %v625 = vpop.f32.mrb[0].mxu0
        %v626 = vpop.f32.mrb[0].mxu0
        %627 = vdwg.mxu0
        %v628 = vpack.c.bf16 %v494, %v494
        %v629 = vpack.c.bf16 %v557, %v557
        %vm630 = vcmask 64512
        %v632 = vsel %vm630, %v628, 0
        %v635 = vsel %vm630, %v629, 0
        %637 = vmatprep.subr.bf16.mxu0 0
        %638 = vmatpush1.bf16.xpose.msra.mxu0 %v635
        %639 = vmatprep.subr.bf16.mxu0 0
        %640 = vmatpush1.bf16.xpose.msra.mxu0 0
        %641 = vmatprep.subr.bf16.mxu0 0
        %642 = vmatpush1.bf16.xpose.msra.mxu0 0
        %643 = vmatprep.subr.bf16.mxu0 0
        %644 = vmatpush1.bf16.xpose.msra.mxu0 0
        %645 = vmatprep.subr.bf16.mxu0 0
        %646 = vmatpush1.bf16.xpose.msra.mxu0 0
        %647 = vmatprep.subr.bf16.mxu0 0
        %648 = vmatpush1.bf16.xpose.msra.mxu0 0
        %649 = vmatprep.subr.bf16.mxu0 0
        %650 = vmatpush1.bf16.xpose.msra.mxu0 0
        %651 = vmatprep.subr.bf16.mxu0 0
        %652 = vmatpush1.bf16.xpose.msra.mxu0 0
        %653 = vmatprep.subr.bf16.mxu0 0
        %654 = vmatpush1.bf16.xpose.msra.mxu0 0
        %655 = vmatprep.subr.bf16.mxu0 0
        %656 = vmatpush1.bf16.xpose.msra.mxu0 0
        %657 = vmatprep.subr.bf16.mxu0 0
        %658 = vmatpush1.bf16.xpose.msra.mxu0 0
        %659 = vmatprep.subr.bf16.mxu0 0
        %660 = vmatpush1.bf16.xpose.msra.mxu0 0
        %661 = vmatprep.subr.bf16.mxu0 0
        %662 = vmatpush1.bf16.xpose.msra.mxu0 0
        %663 = vmatprep.subr.bf16.mxu0 0
        %664 = vmatpush1.bf16.xpose.msra.mxu0 0
        %665 = vmatprep.subr.bf16.mxu0 0
        %666 = vmatpush1.bf16.xpose.msra.mxu0 0
        %667 = vmatprep.subr.bf16.mxu0 0
        %668 = vmatpush1.bf16.xpose.msra.mxu0 0
        %669 = vmatprep.mubr.bf16.mxu0 0
        %670 = vmatmul.mubr.bf16.gmra.mrb[0].mxu0 %v632
        %v671 = vpop.f32.mrb[0].mxu0
        %v672 = vadd.f32 0.0, %v671
        %v673 = vpop.f32.mrb[0].mxu0
        %v674 = vpop.f32.mrb[0].mxu0
        %v675 = vpop.f32.mrb[0].mxu0
        %676 = vdwg.mxu0
        %v677 = vsel %vm630, %v672, -inf
        %678 = vmax.xlane.f32.xlu0 %v677
        %v679 = vpop.xlane.xlu0 %678
        %v680 = vsub.f32 %v672, %v679
        %v681 = vmul.f32 %v680, 1.442695
        %v682 = vpow.pop %v681
        %v683 = vsel %vm630, %v682, 0.0
        %684 = vadd.xlane.f32.xlu0 %v683
        %v685 = vpop.xlane.xlu0 %684
        %v686 = vpack.c.bf16 %v682, %v682
        %v687 = vpack.c.bf16 %v623, %v623
        %v689 = vsel %vm630, %v686, 0
        %vm691 = vcmask 1043456
        %v693 = vsel %vm691, %v687, 0
        %695 = vmatprep.subr.bf16.mxu0 0
        %696 = vmatpush1.bf16.msra.mxu0 %v693
        %697 = vmatprep.subr.bf16.mxu0 0
        %698 = vmatpush1.bf16.msra.mxu0 0
        %699 = vmatprep.subr.bf16.mxu0 0
        %700 = vmatpush1.bf16.msra.mxu0 0
        %701 = vmatprep.subr.bf16.mxu0 0
        %702 = vmatpush1.bf16.msra.mxu0 0
        %703 = vmatprep.subr.bf16.mxu0 0
        %704 = vmatpush1.bf16.msra.mxu0 0
        %705 = vmatprep.subr.bf16.mxu0 0
        %706 = vmatpush1.bf16.msra.mxu0 0
        %707 = vmatprep.subr.bf16.mxu0 0
        %708 = vmatpush1.bf16.msra.mxu0 0
        %709 = vmatprep.subr.bf16.mxu0 0
        %710 = vmatpush1.bf16.msra.mxu0 0
        %711 = vmatprep.subr.bf16.mxu0 0
        %712 = vmatpush1.bf16.msra.mxu0 0
        %713 = vmatprep.subr.bf16.mxu0 0
        %714 = vmatpush1.bf16.msra.mxu0 0
        %715 = vmatprep.subr.bf16.mxu0 0
        %716 = vmatpush1.bf16.msra.mxu0 0
        %717 = vmatprep.subr.bf16.mxu0 0
        %718 = vmatpush1.bf16.msra.mxu0 0
        %719 = vmatprep.subr.bf16.mxu0 0
        %720 = vmatpush1.bf16.msra.mxu0 0
        %721 = vmatprep.subr.bf16.mxu0 0
        %722 = vmatpush1.bf16.msra.mxu0 0
        %723 = vmatprep.subr.bf16.mxu0 0
        %724 = vmatpush1.bf16.msra.mxu0 0
        %725 = vmatprep.subr.bf16.mxu0 0
        %726 = vmatpush1.bf16.msra.mxu0 0
        %727 = vmatprep.mubr.bf16.mxu0 0
        %728 = vmatmul.mubr.bf16.gmra.mrb[0].mxu0 %v689
        %v729 = vpop.f32.mrb[0].mxu0
        %v730 = vadd.f32 0.0, %v729
        %v731 = vpop.f32.mrb[0].mxu0
        %v732 = vpop.f32.mrb[0].mxu0
        %v733 = vpop.f32.mrb[0].mxu0
        %734 = vdwg.mxu0
        %v735 = vrcp.pop %v685
        %v736 = vmul.f32 %v730, %v735
        %v737 = vpack.c.bf16 %v736, %v736
        %v738 = vld [vmem:[%s8] sm:$0xf]
        %s739 = scalar_lea.vmem %s2, 16
        %v740 = vld [vmem:[%s739] sm:$0xf]
        %v741 = vld [vmem:[%s739 + $0x4] sm:$0xf]
        %v742 = vld [vmem:[%s739 + $0x8] sm:$0xf]
        %v743 = vld [vmem:[%s739 + $0xc] sm:$0xf]
        %s744 = scalar_lea.vmem %s3, 1
        %v745 = vld [vmem:[%s744] sm:$0x1]
        %v747 = vlaneseq
        %v748 = vshrl.u32 %v747, 7
        %v749 = vsub.s32 0, %v748
        %v750 = vrot.slane %v745, %v749
        %v756 = vunpack.c.l.b16 %v740
        %v757 = vunpack.c.l.b16 %v741
        %v758 = vunpack.c.l.b16 %v742
        %v759 = vunpack.c.l.b16 %v743
        %v760 = vpack.c.b16 %v757, %v756
        %v761 = vpack.c.b16 %v759, %v758
        %764 = vmatprep.subr.bf16.mxu0 0
        %765 = vmatpush1.bf16.msra.mxu0 %v760
        %766 = vmatprep.subr.bf16.mxu0 0
        %767 = vmatpush1.bf16.msra.mxu0 %v761
        %768 = vmatprep.subr.bf16.mxu0 0
        %769 = vmatpush1.bf16.msra.mxu0 0
        %770 = vmatprep.subr.bf16.mxu0 0
        %771 = vmatpush1.bf16.msra.mxu0 0
        %772 = vmatprep.subr.bf16.mxu0 0
        %773 = vmatpush1.bf16.msra.mxu0 0
        %774 = vmatprep.subr.bf16.mxu0 0
        %775 = vmatpush1.bf16.msra.mxu0 0
        %776 = vmatprep.subr.bf16.mxu0 0
        %777 = vmatpush1.bf16.msra.mxu0 0
        %778 = vmatprep.subr.bf16.mxu0 0
        %779 = vmatpush1.bf16.msra.mxu0 0
        %780 = vmatprep.subr.bf16.mxu0 0
        %781 = vmatpush1.bf16.msra.mxu0 0
        %782 = vmatprep.subr.bf16.mxu0 0
        %783 = vmatpush1.bf16.msra.mxu0 0
        %784 = vmatprep.subr.bf16.mxu0 0
        %785 = vmatpush1.bf16.msra.mxu0 0
        %786 = vmatprep.subr.bf16.mxu0 0
        %787 = vmatpush1.bf16.msra.mxu0 0
        %788 = vmatprep.subr.bf16.mxu0 0
        %789 = vmatpush1.bf16.msra.mxu0 0
        %790 = vmatprep.subr.bf16.mxu0 0
        %791 = vmatpush1.bf16.msra.mxu0 0
        %792 = vmatprep.subr.bf16.mxu0 0
        %793 = vmatpush1.bf16.msra.mxu0 0
        %794 = vmatprep.subr.bf16.mxu0 0
        %795 = vmatpush1.bf16.msra.mxu0 0
        %796 = vmatprep.mubr.bf16.mxu0 0
        %797 = vmatmul.mubr.bf16.gmra.mrb[0].mxu0 %v457
        %v798 = vpop.f32.mrb[0].mxu0
        %v799 = vadd.f32 %v750, %v798
        %v800 = vpop.f32.mrb[0].mxu0
        %v801 = vpop.f32.mrb[0].mxu0
        %v802 = vpop.f32.mrb[0].mxu0
        %803 = vdwg.mxu0
        %s804 = scalar_lea.vmem %s4, 16
        %v805 = vld [vmem:[%s804] sm:$0xf]
        %v806 = vld [vmem:[%s804 + $0x4] sm:$0xf]
        %v807 = vld [vmem:[%s804 + $0x8] sm:$0xf]
        %v808 = vld [vmem:[%s804 + $0xc] sm:$0xf]
        %s809 = scalar_lea.vmem %s5, 1
        %v810 = vld [vmem:[%s809] sm:$0x1]
        %v812 = vlaneseq
        %v813 = vshrl.u32 %v812, 7
        %v814 = vsub.s32 0, %v813
        %v815 = vrot.slane %v810, %v814
        %v821 = vunpack.c.l.b16 %v805
        %v822 = vunpack.c.l.b16 %v806
        %v823 = vunpack.c.l.b16 %v807
        %v824 = vunpack.c.l.b16 %v808
        %v825 = vpack.c.b16 %v822, %v821
        %v826 = vpack.c.b16 %v824, %v823
        %829 = vmatprep.subr.bf16.mxu0 0
        %830 = vmatpush1.bf16.msra.mxu0 %v825
        %831 = vmatprep.subr.bf16.mxu0 0
        %832 = vmatpush1.bf16.msra.mxu0 %v826
        %833 = vmatprep.subr.bf16.mxu0 0
        %834 = vmatpush1.bf16.msra.mxu0 0
        %835 = vmatprep.subr.bf16.mxu0 0
        %836 = vmatpush1.bf16.msra.mxu0 0
        %837 = vmatprep.subr.bf16.mxu0 0
        %838 = vmatpush1.bf16.msra.mxu0 0
        %839 = vmatprep.subr.bf16.mxu0 0
        %840 = vmatpush1.bf16.msra.mxu0 0
        %841 = vmatprep.subr.bf16.mxu0 0
        %842 = vmatpush1.bf16.msra.mxu0 0
        %843 = vmatprep.subr.bf16.mxu0 0
        %844 = vmatpush1.bf16.msra.mxu0 0
        %845 = vmatprep.subr.bf16.mxu0 0
        %846 = vmatpush1.bf16.msra.mxu0 0
        %847 = vmatprep.subr.bf16.mxu0 0
        %848 = vmatpush1.bf16.msra.mxu0 0
        %849 = vmatprep.subr.bf16.mxu0 0
        %850 = vmatpush1.bf16.msra.mxu0 0
        %851 = vmatprep.subr.bf16.mxu0 0
        %852 = vmatpush1.bf16.msra.mxu0 0
        %853 = vmatprep.subr.bf16.mxu0 0
        %854 = vmatpush1.bf16.msra.mxu0 0
        %855 = vmatprep.subr.bf16.mxu0 0
        %856 = vmatpush1.bf16.msra.mxu0 0
        %857 = vmatprep.subr.bf16.mxu0 0
        %858 = vmatpush1.bf16.msra.mxu0 0
        %859 = vmatprep.subr.bf16.mxu0 0
        %860 = vmatpush1.bf16.msra.mxu0 0
        %861 = vmatprep.mubr.bf16.mxu0 0
        %862 = vmatmul.mubr.bf16.gmra.mrb[0].mxu0 %v457
        %v863 = vpop.f32.mrb[0].mxu0
        %v864 = vadd.f32 %v815, %v863
        %v865 = vpop.f32.mrb[0].mxu0
        %v866 = vpop.f32.mrb[0].mxu0
        %v867 = vpop.f32.mrb[0].mxu0
        %868 = vdwg.mxu0
        %s869 = scalar_lea.vmem %s6, 16
        %v870 = vld [vmem:[%s869] sm:$0xf]
        %v871 = vld [vmem:[%s869 + $0x4] sm:$0xf]
        %v872 = vld [vmem:[%s869 + $0x8] sm:$0xf]
        %v873 = vld [vmem:[%s869 + $0xc] sm:$0xf]
        %s874 = scalar_lea.vmem %s7, 1
        %v875 = vld [vmem:[%s874] sm:$0x1]
        %v877 = vlaneseq
        %v878 = vshrl.u32 %v877, 7
        %v879 = vsub.s32 0, %v878
        %v880 = vrot.slane %v875, %v879
        %v886 = vunpack.c.l.b16 %v870
        %v887 = vunpack.c.l.b16 %v871
        %v888 = vunpack.c.l.b16 %v872
        %v889 = vunpack.c.l.b16 %v873
        %v890 = vpack.c.b16 %v887, %v886
        %v891 = vpack.c.b16 %v889, %v888
        %894 = vmatprep.subr.bf16.mxu0 0
        %895 = vmatpush1.bf16.msra.mxu0 %v890
        %896 = vmatprep.subr.bf16.mxu0 0
        %897 = vmatpush1.bf16.msra.mxu0 %v891
        %898 = vmatprep.subr.bf16.mxu0 0
        %899 = vmatpush1.bf16.msra.mxu0 0
        %900 = vmatprep.subr.bf16.mxu0 0
        %901 = vmatpush1.bf16.msra.mxu0 0
        %902 = vmatprep.subr.bf16.mxu0 0
        %903 = vmatpush1.bf16.msra.mxu0 0
        %904 = vmatprep.subr.bf16.mxu0 0
        %905 = vmatpush1.bf16.msra.mxu0 0
        %906 = vmatprep.subr.bf16.mxu0 0
        %907 = vmatpush1.bf16.msra.mxu0 0
        %908 = vmatprep.subr.bf16.mxu0 0
        %909 = vmatpush1.bf16.msra.mxu0 0
        %910 = vmatprep.subr.bf16.mxu0 0
        %911 = vmatpush1.bf16.msra.mxu0 0
        %912 = vmatprep.subr.bf16.mxu0 0
        %913 = vmatpush1.bf16.msra.mxu0 0
        %914 = vmatprep.subr.bf16.mxu0 0
        %915 = vmatpush1.bf16.msra.mxu0 0
        %916 = vmatprep.subr.bf16.mxu0 0
        %917 = vmatpush1.bf16.msra.mxu0 0
        %918 = vmatprep.subr.bf16.mxu0 0
        %919 = vmatpush1.bf16.msra.mxu0 0
        %920 = vmatprep.subr.bf16.mxu0 0
        %921 = vmatpush1.bf16.msra.mxu0 0
        %922 = vmatprep.subr.bf16.mxu0 0
        %923 = vmatpush1.bf16.msra.mxu0 0
        %924 = vmatprep.subr.bf16.mxu0 0
        %925 = vmatpush1.bf16.msra.mxu0 0
        %926 = vmatprep.mubr.bf16.mxu0 0
        %927 = vmatmul.mubr.bf16.gmra.mrb[0].mxu0 %v586
        %v928 = vpop.f32.mrb[0].mxu0
        %v929 = vadd.f32 %v880, %v928
        %v930 = vpop.f32.mrb[0].mxu0
        %v931 = vpop.f32.mrb[0].mxu0
        %v932 = vpop.f32.mrb[0].mxu0
        %933 = vdwg.mxu0
        %v934 = vpack.c.bf16 %v799, %v799
        %v935 = vpack.c.bf16 %v864, %v864
        %v937 = vsel %vm630, %v934, 0
        %v940 = vsel %vm630, %v935, 0
        %942 = vmatprep.subr.bf16.mxu0 0
        %943 = vmatpush1.bf16.xpose.msra.mxu0 %v940
        %944 = vmatprep.subr.bf16.mxu0 0
        %945 = vmatpush1.bf16.xpose.msra.mxu0 0
        %946 = vmatprep.subr.bf16.mxu0 0
        %947 = vmatpush1.bf16.xpose.msra.mxu0 0
        %948 = vmatprep.subr.bf16.mxu0 0
        %949 = vmatpush1.bf16.xpose.msra.mxu0 0
        %950 = vmatprep.subr.bf16.mxu0 0
        %951 = vmatpush1.bf16.xpose.msra.mxu0 0
        %952 = vmatprep.subr.bf16.mxu0 0
        %953 = vmatpush1.bf16.xpose.msra.mxu0 0
        %954 = vmatprep.subr.bf16.mxu0 0
        %955 = vmatpush1.bf16.xpose.msra.mxu0 0
        %956 = vmatprep.subr.bf16.mxu0 0
        %957 = vmatpush1.bf16.xpose.msra.mxu0 0
        %958 = vmatprep.subr.bf16.mxu0 0
        %959 = vmatpush1.bf16.xpose.msra.mxu0 0
        %960 = vmatprep.subr.bf16.mxu0 0
        %961 = vmatpush1.bf16.xpose.msra.mxu0 0
        %962 = vmatprep.subr.bf16.mxu0 0
        %963 = vmatpush1.bf16.xpose.msra.mxu0 0
        %964 = vmatprep.subr.bf16.mxu0 0
        %965 = vmatpush1.bf16.xpose.msra.mxu0 0
        %966 = vmatprep.subr.bf16.mxu0 0
        %967 = vmatpush1.bf16.xpose.msra.mxu0 0
        %968 = vmatprep.subr.bf16.mxu0 0
        %969 = vmatpush1.bf16.xpose.msra.mxu0 0
        %970 = vmatprep.subr.bf16.mxu0 0
        %971 = vmatpush1.bf16.xpose.msra.mxu0 0
        %972 = vmatprep.subr.bf16.mxu0 0
        %973 = vmatpush1.bf16.xpose.msra.mxu0 0
        %974 = vmatprep.mubr.bf16.mxu0 0
        %975 = vmatmul.mubr.bf16.gmra.mrb[0].mxu0 %v937
        %v976 = vpop.f32.mrb[0].mxu0
        %v977 = vadd.f32 0.0, %v976
        %v978 = vpop.f32.mrb[0].mxu0
        %v979 = vpop.f32.mrb[0].mxu0
        %v980 = vpop.f32.mrb[0].mxu0
        %981 = vdwg.mxu0
        %v982 = vsel %vm630, %v977, -inf
        %983 = vmax.xlane.f32.xlu0 %v982
        %v984 = vpop.xlane.xlu0 %983
        %v985 = vsub.f32 %v977, %v984
        %v986 = vmul.f32 %v985, 1.442695
        %v987 = vpow.pop %v986
        %v988 = vsel %vm630, %v987, 0.0
        %989 = vadd.xlane.f32.xlu0 %v988
        %v990 = vpop.xlane.xlu0 %989
        %v991 = vpack.c.bf16 %v987, %v987
        %v992 = vpack.c.bf16 %v929, %v929
        %v994 = vsel %vm630, %v991, 0
        %v997 = vsel %vm691, %v992, 0
        %999 = vmatprep.subr.bf16.mxu0 0
        %1000 = vmatpush1.bf16.msra.mxu0 %v997
        %1001 = vmatprep.subr.bf16.mxu0 0
        %1002 = vmatpush1.bf16.msra.mxu0 0
        %1003 = vmatprep.subr.bf16.mxu0 0
        %1004 = vmatpush1.bf16.msra.mxu0 0
        %1005 = vmatprep.subr.bf16.mxu0 0
        %1006 = vmatpush1.bf16.msra.mxu0 0
        %1007 = vmatprep.subr.bf16.mxu0 0
        %1008 = vmatpush1.bf16.msra.mxu0 0
        %1009 = vmatprep.subr.bf16.mxu0 0
        %1010 = vmatpush1.bf16.msra.mxu0 0
        %1011 = vmatprep.subr.bf16.mxu0 0
        %1012 = vmatpush1.bf16.msra.mxu0 0
        %1013 = vmatprep.subr.bf16.mxu0 0
        %1014 = vmatpush1.bf16.msra.mxu0 0
        %1015 = vmatprep.subr.bf16.mxu0 0
        %1016 = vmatpush1.bf16.msra.mxu0 0
        %1017 = vmatprep.subr.bf16.mxu0 0
        %1018 = vmatpush1.bf16.msra.mxu0 0
        %1019 = vmatprep.subr.bf16.mxu0 0
        %1020 = vmatpush1.bf16.msra.mxu0 0
        %1021 = vmatprep.subr.bf16.mxu0 0
        %1022 = vmatpush1.bf16.msra.mxu0 0
        %1023 = vmatprep.subr.bf16.mxu0 0
        %1024 = vmatpush1.bf16.msra.mxu0 0
        %1025 = vmatprep.subr.bf16.mxu0 0
        %1026 = vmatpush1.bf16.msra.mxu0 0
        %1027 = vmatprep.subr.bf16.mxu0 0
        %1028 = vmatpush1.bf16.msra.mxu0 0
        %1029 = vmatprep.subr.bf16.mxu0 0
        %1030 = vmatpush1.bf16.msra.mxu0 0
        %1031 = vmatprep.mubr.bf16.mxu0 0
        %1032 = vmatmul.mubr.bf16.gmra.mrb[0].mxu0 %v994
        %v1033 = vpop.f32.mrb[0].mxu0
        %v1034 = vadd.f32 0.0, %v1033
        %v1035 = vpop.f32.mrb[0].mxu0
        %v1036 = vpop.f32.mrb[0].mxu0
        %v1037 = vpop.f32.mrb[0].mxu0
        %1038 = vdwg.mxu0
        %v1039 = vrcp.pop %v990
        %v1040 = vmul.f32 %v1034, %v1039
        %v1041 = vpack.c.bf16 %v1040, %v1040
        %s1042 = scalar_lea.vmem %s8, 4
        %v1043 = vld [vmem:[%s1042] sm:$0xf]
        %v1045 = vsel %vm630, %v1041, 0
        %v1048 = vsel %vm691, %v1043, 0
        %1050 = vmatprep.subr.bf16.mxu0 0
        %1051 = vmatpush1.bf16.msra.mxu0 %v1048
        %1052 = vmatprep.subr.bf16.mxu0 0
        %1053 = vmatpush1.bf16.msra.mxu0 0
        %1054 = vmatprep.subr.bf16.mxu0 0
        %1055 = vmatpush1.bf16.msra.mxu0 0
        %1056 = vmatprep.subr.bf16.mxu0 0
        %1057 = vmatpush1.bf16.msra.mxu0 0
        %1058 = vmatprep.subr.bf16.mxu0 0
        %1059 = vmatpush1.bf16.msra.mxu0 0
        %1060 = vmatprep.subr.bf16.mxu0 0
        %1061 = vmatpush1.bf16.msra.mxu0 0
        %1062 = vmatprep.subr.bf16.mxu0 0
        %1063 = vmatpush1.bf16.msra.mxu0 0
        %1064 = vmatprep.subr.bf16.mxu0 0
        %1065 = vmatpush1.bf16.msra.mxu0 0
        %1066 = vmatprep.subr.bf16.mxu0 0
        %1067 = vmatpush1.bf16.msra.mxu0 0
        %1068 = vmatprep.subr.bf16.mxu0 0
        %1069 = vmatpush1.bf16.msra.mxu0 0
        %1070 = vmatprep.subr.bf16.mxu0 0
        %1071 = vmatpush1.bf16.msra.mxu0 0
        %1072 = vmatprep.subr.bf16.mxu0 0
        %1073 = vmatpush1.bf16.msra.mxu0 0
        %1074 = vmatprep.subr.bf16.mxu0 0
        %1075 = vmatpush1.bf16.msra.mxu0 0
        %1076 = vmatprep.subr.bf16.mxu0 0
        %1077 = vmatpush1.bf16.msra.mxu0 0
        %1078 = vmatprep.subr.bf16.mxu0 0
        %1079 = vmatpush1.bf16.msra.mxu0 0
        %1080 = vmatprep.subr.bf16.mxu0 0
        %1081 = vmatpush1.bf16.msra.mxu0 0
        %1082 = vmatprep.mubr.bf16.mxu0 0
        %1083 = vmatmul.mubr.bf16.gmra.mrb[0].mxu0 %v1045
        %v1084 = vpop.f32.mrb[0].mxu0
        %v1085 = vadd.f32 0.0, %v1084
        %v1086 = vpop.f32.mrb[0].mxu0
        %v1087 = vpop.f32.mrb[0].mxu0
        %v1088 = vpop.f32.mrb[0].mxu0
        %1089 = vdwg.mxu0
        %v1091 = vsel %vm630, %v737, 0
        %v1094 = vsel %vm691, %v738, 0
        %1096 = vmatprep.subr.bf16.mxu0 0
        %1097 = vmatpush1.bf16.msra.mxu0 %v1094
        %1098 = vmatprep.subr.bf16.mxu0 0
        %1099 = vmatpush1.bf16.msra.mxu0 0
        %1100 = vmatprep.subr.bf16.mxu0 0
        %1101 = vmatpush1.bf16.msra.mxu0 0
        %1102 = vmatprep.subr.bf16.mxu0 0
        %1103 = vmatpush1.bf16.msra.mxu0 0
        %1104 = vmatprep.subr.bf16.mxu0 0
        %1105 = vmatpush1.bf16.msra.mxu0 0
        %1106 = vmatprep.subr.bf16.mxu0 0
        %1107 = vmatpush1.bf16.msra.mxu0 0
        %1108 = vmatprep.subr.bf16.mxu0 0
        %1109 = vmatpush1.bf16.msra.mxu0 0
        %1110 = vmatprep.subr.bf16.mxu0 0
        %1111 = vmatpush1.bf16.msra.mxu0 0
        %1112 = vmatprep.subr.bf16.mxu0 0
        %1113 = vmatpush1.bf16.msra.mxu0 0
        %1114 = vmatprep.subr.bf16.mxu0 0
        %1115 = vmatpush1.bf16.msra.mxu0 0
        %1116 = vmatprep.subr.bf16.mxu0 0
        %1117 = vmatpush1.bf16.msra.mxu0 0
        %1118 = vmatprep.subr.bf16.mxu0 0
        %1119 = vmatpush1.bf16.msra.mxu0 0
        %1120 = vmatprep.subr.bf16.mxu0 0
        %1121 = vmatpush1.bf16.msra.mxu0 0
        %1122 = vmatprep.subr.bf16.mxu0 0
        %1123 = vmatpush1.bf16.msra.mxu0 0
        %1124 = vmatprep.subr.bf16.mxu0 0
        %1125 = vmatpush1.bf16.msra.mxu0 0
        %1126 = vmatprep.subr.bf16.mxu0 0
        %1127 = vmatpush1.bf16.msra.mxu0 0
        %1128 = vmatprep.mubr.bf16.mxu0 0
        %1129 = vmatmul.mubr.bf16.gmra.mrb[0].mxu0 %v1091
        %v1130 = vpop.f32.mrb[0].mxu0
        %v1131 = vadd.f32 %v1085, %v1130
        %v1132 = vpop.f32.mrb[0].mxu0
        %v1133 = vpop.f32.mrb[0].mxu0
        %v1134 = vpop.f32.mrb[0].mxu0
        %1135 = vdwg.mxu0
        %s1136 = scalar_lea.vmem %s2, 32
        %v1137 = vld [vmem:[%s1136] sm:$0xf]
        %v1138 = vld [vmem:[%s1136 + $0x4] sm:$0xf]
        %v1139 = vld [vmem:[%s1136 + $0x8] sm:$0xf]
        %v1140 = vld [vmem:[%s1136 + $0xc] sm:$0xf]
        %s1141 = scalar_lea.vmem %s3, 2
        %v1142 = vld [vmem:[%s1141] sm:$0x1]
        %v1144 = vlaneseq
        %v1145 = vshrl.u32 %v1144, 7
        %v1146 = vsub.s32 0, %v1145
        %v1147 = vrot.slane %v1142, %v1146
        %v1153 = vunpack.c.l.b16 %v1137
        %v1154 = vunpack.c.l.b16 %v1138
        %v1155 = vunpack.c.l.b16 %v1139
        %v1156 = vunpack.c.l.b16 %v1140
        %v1157 = vpack.c.b16 %v1154, %v1153
        %v1158 = vpack.c.b16 %v1156, %v1155
        %1161 = vmatprep.subr.bf16.mxu0 0
        %1162 = vmatpush1.bf16.msra.mxu0 %v1157
        %1163 = vmatprep.subr.bf16.mxu0 0
        %1164 = vmatpush1.bf16.msra.mxu0 %v1158
        %1165 = vmatprep.subr.bf16.mxu0 0
        %1166 = vmatpush1.bf16.msra.mxu0 0
        %1167 = vmatprep.subr.bf16.mxu0 0
        %1168 = vmatpush1.bf16.msra.mxu0 0
        %1169 = vmatprep.subr.bf16.mxu0 0
        %1170 = vmatpush1.bf16.msra.mxu0 0
        %1171 = vmatprep.subr.bf16.mxu0 0
        %1172 = vmatpush1.bf16.msra.mxu0 0
        %1173 = vmatprep.subr.bf16.mxu0 0
        %1174 = vmatpush1.bf16.msra.mxu0 0
        %1175 = vmatprep.subr.bf16.mxu0 0
        %1176 = vmatpush1.bf16.msra.mxu0 0
        %1177 = vmatprep.subr.bf16.mxu0 0
        %1178 = vmatpush1.bf16.msra.mxu0 0
        %1179 = vmatprep.subr.bf16.mxu0 0
        %1180 = vmatpush1.bf16.msra.mxu0 0
        %1181 = vmatprep.subr.bf16.mxu0 0
        %1182 = vmatpush1.bf16.msra.mxu0 0
        %1183 = vmatprep.subr.bf16.mxu0 0
        %1184 = vmatpush1.bf16.msra.mxu0 0
        %1185 = vmatprep.subr.bf16.mxu0 0
        %1186 = vmatpush1.bf16.msra.mxu0 0
        %1187 = vmatprep.subr.bf16.mxu0 0
        %1188 = vmatpush1.bf16.msra.mxu0 0
        %1189 = vmatprep.subr.bf16.mxu0 0
        %1190 = vmatpush1.bf16.msra.mxu0 0
        %1191 = vmatprep.subr.bf16.mxu0 0
        %1192 = vmatpush1.bf16.msra.mxu0 0
        %1193 = vmatprep.mubr.bf16.mxu0 0
        %1194 = vmatmul.mubr.bf16.gmra.mrb[0].mxu0 %v457
        %v1195 = vpop.f32.mrb[0].mxu0
        %v1196 = vadd.f32 %v1147, %v1195
        %v1197 = vpop.f32.mrb[0].mxu0
        %v1198 = vpop.f32.mrb[0].mxu0
        %v1199 = vpop.f32.mrb[0].mxu0
        %1200 = vdwg.mxu0
        %s1201 = scalar_lea.vmem %s4, 32
        %v1202 = vld [vmem:[%s1201] sm:$0xf]
        %v1203 = vld [vmem:[%s1201 + $0x4] sm:$0xf]
        %v1204 = vld [vmem:[%s1201 + $0x8] sm:$0xf]
        %v1205 = vld [vmem:[%s1201 + $0xc] sm:$0xf]
        %s1206 = scalar_lea.vmem %s5, 2
        %v1207 = vld [vmem:[%s1206] sm:$0x1]
        %v1209 = vlaneseq
        %v1210 = vshrl.u32 %v1209, 7
        %v1211 = vsub.s32 0, %v1210
        %v1212 = vrot.slane %v1207, %v1211
        %v1218 = vunpack.c.l.b16 %v1202
        %v1219 = vunpack.c.l.b16 %v1203
        %v1220 = vunpack.c.l.b16 %v1204
        %v1221 = vunpack.c.l.b16 %v1205
        %v1222 = vpack.c.b16 %v1219, %v1218
        %v1223 = vpack.c.b16 %v1221, %v1220
        %1226 = vmatprep.subr.bf16.mxu0 0
        %1227 = vmatpush1.bf16.msra.mxu0 %v1222
        %1228 = vmatprep.subr.bf16.mxu0 0
        %1229 = vmatpush1.bf16.msra.mxu0 %v1223
        %1230 = vmatprep.subr.bf16.mxu0 0
        %1231 = vmatpush1.bf16.msra.mxu0 0
        %1232 = vmatprep.subr.bf16.mxu0 0
        %1233 = vmatpush1.bf16.msra.mxu0 0
        %1234 = vmatprep.subr.bf16.mxu0 0
        %1235 = vmatpush1.bf16.msra.mxu0 0
        %1236 = vmatprep.subr.bf16.mxu0 0
        %1237 = vmatpush1.bf16.msra.mxu0 0
        %1238 = vmatprep.subr.bf16.mxu0 0
        %1239 = vmatpush1.bf16.msra.mxu0 0
        %1240 = vmatprep.subr.bf16.mxu0 0
        %1241 = vmatpush1.bf16.msra.mxu0 0
        %1242 = vmatprep.subr.bf16.mxu0 0
        %1243 = vmatpush1.bf16.msra.mxu0 0
        %1244 = vmatprep.subr.bf16.mxu0 0
        %1245 = vmatpush1.bf16.msra.mxu0 0
        %1246 = vmatprep.subr.bf16.mxu0 0
        %1247 = vmatpush1.bf16.msra.mxu0 0
        %1248 = vmatprep.subr.bf16.mxu0 0
        %1249 = vmatpush1.bf16.msra.mxu0 0
        %1250 = vmatprep.subr.bf16.mxu0 0
        %1251 = vmatpush1.bf16.msra.mxu0 0
        %1252 = vmatprep.subr.bf16.mxu0 0
        %1253 = vmatpush1.bf16.msra.mxu0 0
        %1254 = vmatprep.subr.bf16.mxu0 0
        %1255 = vmatpush1.bf16.msra.mxu0 0
        %1256 = vmatprep.subr.bf16.mxu0 0
        %1257 = vmatpush1.bf16.msra.mxu0 0
        %1258 = vmatprep.mubr.bf16.mxu0 0
        %1259 = vmatmul.mubr.bf16.gmra.mrb[0].mxu0 %v457
        %v1260 = vpop.f32.mrb[0].mxu0
        %v1261 = vadd.f32 %v1212, %v1260
        %v1262 = vpop.f32.mrb[0].mxu0
        %v1263 = vpop.f32.mrb[0].mxu0
        %v1264 = vpop.f32.mrb[0].mxu0
        %1265 = vdwg.mxu0
        %s1266 = scalar_lea.vmem %s6, 32
        %v1267 = vld [vmem:[%s1266] sm:$0xf]
        %v1268 = vld [vmem:[%s1266 + $0x4] sm:$0xf]
        %v1269 = vld [vmem:[%s1266 + $0x8] sm:$0xf]
        %v1270 = vld [vmem:[%s1266 + $0xc] sm:$0xf]
        %s1271 = scalar_lea.vmem %s7, 2
        %v1272 = vld [vmem:[%s1271] sm:$0x1]
        %v1274 = vlaneseq
        %v1275 = vshrl.u32 %v1274, 7
        %v1276 = vsub.s32 0, %v1275
        %v1277 = vrot.slane %v1272, %v1276
        %v1283 = vunpack.c.l.b16 %v1267
        %v1284 = vunpack.c.l.b16 %v1268
        %v1285 = vunpack.c.l.b16 %v1269
        %v1286 = vunpack.c.l.b16 %v1270
        %v1287 = vpack.c.b16 %v1284, %v1283
        %v1288 = vpack.c.b16 %v1286, %v1285
        %1291 = vmatprep.subr.bf16.mxu0 0
        %1292 = vmatpush1.bf16.msra.mxu0 %v1287
        %1293 = vmatprep.subr.bf16.mxu0 0
        %1294 = vmatpush1.bf16.msra.mxu0 %v1288
        %1295 = vmatprep.subr.bf16.mxu0 0
        %1296 = vmatpush1.bf16.msra.mxu0 0
        %1297 = vmatprep.subr.bf16.mxu0 0
        %1298 = vmatpush1.bf16.msra.mxu0 0
        %1299 = vmatprep.subr.bf16.mxu0 0
        %1300 = vmatpush1.bf16.msra.mxu0 0
        %1301 = vmatprep.subr.bf16.mxu0 0
        %1302 = vmatpush1.bf16.msra.mxu0 0
        %1303 = vmatprep.subr.bf16.mxu0 0
        %1304 = vmatpush1.bf16.msra.mxu0 0
        %1305 = vmatprep.subr.bf16.mxu0 0
        %1306 = vmatpush1.bf16.msra.mxu0 0
        %1307 = vmatprep.subr.bf16.mxu0 0
        %1308 = vmatpush1.bf16.msra.mxu0 0
        %1309 = vmatprep.subr.bf16.mxu0 0
        %1310 = vmatpush1.bf16.msra.mxu0 0
        %1311 = vmatprep.subr.bf16.mxu0 0
        %1312 = vmatpush1.bf16.msra.mxu0 0
        %1313 = vmatprep.subr.bf16.mxu0 0
        %1314 = vmatpush1.bf16.msra.mxu0 0
        %1315 = vmatprep.subr.bf16.mxu0 0
        %1316 = vmatpush1.bf16.msra.mxu0 0
        %1317 = vmatprep.subr.bf16.mxu0 0
        %1318 = vmatpush1.bf16.msra.mxu0 0
        %1319 = vmatprep.subr.bf16.mxu0 0
        %1320 = vmatpush1.bf16.msra.mxu0 0
        %1321 = vmatprep.subr.bf16.mxu0 0
        %1322 = vmatpush1.bf16.msra.mxu0 0
        %1323 = vmatprep.mubr.bf16.mxu0 0
        %1324 = vmatmul.mubr.bf16.gmra.mrb[0].mxu0 %v586
        %v1325 = vpop.f32.mrb[0].mxu0
        %v1326 = vadd.f32 %v1277, %v1325
        %v1327 = vpop.f32.mrb[0].mxu0
        %v1328 = vpop.f32.mrb[0].mxu0
        %v1329 = vpop.f32.mrb[0].mxu0
        %1330 = vdwg.mxu0
        %v1331 = vpack.c.bf16 %v1196, %v1196
        %v1332 = vpack.c.bf16 %v1261, %v1261
        %v1334 = vsel %vm630, %v1331, 0
        %v1337 = vsel %vm630, %v1332, 0
        %1339 = vmatprep.subr.bf16.mxu0 0
        %1340 = vmatpush1.bf16.xpose.msra.mxu0 %v1337
        %1341 = vmatprep.subr.bf16.mxu0 0
        %1342 = vmatpush1.bf16.xpose.msra.mxu0 0
        %1343 = vmatprep.subr.bf16.mxu0 0
        %1344 = vmatpush1.bf16.xpose.msra.mxu0 0
        %1345 = vmatprep.subr.bf16.mxu0 0
        %1346 = vmatpush1.bf16.xpose.msra.mxu0 0
        %1347 = vmatprep.subr.bf16.mxu0 0
        %1348 = vmatpush1.bf16.xpose.msra.mxu0 0
        %1349 = vmatprep.subr.bf16.mxu0 0
        %1350 = vmatpush1.bf16.xpose.msra.mxu0 0
        %1351 = vmatprep.subr.bf16.mxu0 0
        %1352 = vmatpush1.bf16.xpose.msra.mxu0 0
        %1353 = vmatprep.subr.bf16.mxu0 0
        %1354 = vmatpush1.bf16.xpose.msra.mxu0 0
        %1355 = vmatprep.subr.bf16.mxu0 0
        %1356 = vmatpush1.bf16.xpose.msra.mxu0 0
        %1357 = vmatprep.subr.bf16.mxu0 0
        %1358 = vmatpush1.bf16.xpose.msra.mxu0 0
        %1359 = vmatprep.subr.bf16.mxu0 0
        %1360 = vmatpush1.bf16.xpose.msra.mxu0 0
        %1361 = vmatprep.subr.bf16.mxu0 0
        %1362 = vmatpush1.bf16.xpose.msra.mxu0 0
        %1363 = vmatprep.subr.bf16.mxu0 0
        %1364 = vmatpush1.bf16.xpose.msra.mxu0 0
        %1365 = vmatprep.subr.bf16.mxu0 0
        %1366 = vmatpush1.bf16.xpose.msra.mxu0 0
        %1367 = vmatprep.subr.bf16.mxu0 0
        %1368 = vmatpush1.bf16.xpose.msra.mxu0 0
        %1369 = vmatprep.subr.bf16.mxu0 0
        %1370 = vmatpush1.bf16.xpose.msra.mxu0 0
        %1371 = vmatprep.mubr.bf16.mxu0 0
        %1372 = vmatmul.mubr.bf16.gmra.mrb[0].mxu0 %v1334
        %v1373 = vpop.f32.mrb[0].mxu0
        %v1374 = vadd.f32 0.0, %v1373
        %v1375 = vpop.f32.mrb[0].mxu0
        %v1376 = vpop.f32.mrb[0].mxu0
        %v1377 = vpop.f32.mrb[0].mxu0
        %1378 = vdwg.mxu0
        %v1379 = vsel %vm630, %v1374, -inf
        %1380 = vmax.xlane.f32.xlu0 %v1379
        %v1381 = vpop.xlane.xlu0 %1380
        %v1382 = vsub.f32 %v1374, %v1381
        %v1383 = vmul.f32 %v1382, 1.442695
        %v1384 = vpow.pop %v1383
        %v1385 = vsel %vm630, %v1384, 0.0
        %1386 = vadd.xlane.f32.xlu0 %v1385
        %v1387 = vpop.xlane.xlu0 %1386
        %v1388 = vpack.c.bf16 %v1384, %v1384
        %v1389 = vpack.c.bf16 %v1326, %v1326
        %v1391 = vsel %vm630, %v1388, 0
        %v1394 = vsel %vm691, %v1389, 0
        %1396 = vmatprep.subr.bf16.mxu0 0
        %1397 = vmatpush1.bf16.msra.mxu0 %v1394
        %1398 = vmatprep.subr.bf16.mxu0 0
        %1399 = vmatpush1.bf16.msra.mxu0 0
        %1400 = vmatprep.subr.bf16.mxu0 0
        %1401 = vmatpush1.bf16.msra.mxu0 0
        %1402 = vmatprep.subr.bf16.mxu0 0
        %1403 = vmatpush1.bf16.msra.mxu0 0
        %1404 = vmatprep.subr.bf16.mxu0 0
        %1405 = vmatpush1.bf16.msra.mxu0 0
        %1406 = vmatprep.subr.bf16.mxu0 0
        %1407 = vmatpush1.bf16.msra.mxu0 0
        %1408 = vmatprep.subr.bf16.mxu0 0
        %1409 = vmatpush1.bf16.msra.mxu0 0
        %1410 = vmatprep.subr.bf16.mxu0 0
        %1411 = vmatpush1.bf16.msra.mxu0 0
        %1412 = vmatprep.subr.bf16.mxu0 0
        %1413 = vmatpush1.bf16.msra.mxu0 0
        %1414 = vmatprep.subr.bf16.mxu0 0
        %1415 = vmatpush1.bf16.msra.mxu0 0
        %1416 = vmatprep.subr.bf16.mxu0 0
        %1417 = vmatpush1.bf16.msra.mxu0 0
        %1418 = vmatprep.subr.bf16.mxu0 0
        %1419 = vmatpush1.bf16.msra.mxu0 0
        %1420 = vmatprep.subr.bf16.mxu0 0
        %1421 = vmatpush1.bf16.msra.mxu0 0
        %1422 = vmatprep.subr.bf16.mxu0 0
        %1423 = vmatpush1.bf16.msra.mxu0 0
        %1424 = vmatprep.subr.bf16.mxu0 0
        %1425 = vmatpush1.bf16.msra.mxu0 0
        %1426 = vmatprep.subr.bf16.mxu0 0
        %1427 = vmatpush1.bf16.msra.mxu0 0
        %1428 = vmatprep.mubr.bf16.mxu0 0
        %1429 = vmatmul.mubr.bf16.gmra.mrb[0].mxu0 %v1391
        %v1430 = vpop.f32.mrb[0].mxu0
        %v1431 = vadd.f32 0.0, %v1430
        %v1432 = vpop.f32.mrb[0].mxu0
        %v1433 = vpop.f32.mrb[0].mxu0
        %v1434 = vpop.f32.mrb[0].mxu0
        %1435 = vdwg.mxu0
        %v1436 = vrcp.pop %v1387
        %v1437 = vmul.f32 %v1431, %v1436
        %v1438 = vpack.c.bf16 %v1437, %v1437
        %s1439 = scalar_lea.vmem %s8, 8
        %v1440 = vld [vmem:[%s1439] sm:$0xf]
        %v1442 = vsel %vm630, %v1438, 0
        %v1445 = vsel %vm691, %v1440, 0
        %1447 = vmatprep.subr.bf16.mxu0 0
        %1448 = vmatpush1.bf16.msra.mxu0 %v1445
        %1449 = vmatprep.subr.bf16.mxu0 0
        %1450 = vmatpush1.bf16.msra.mxu0 0
        %1451 = vmatprep.subr.bf16.mxu0 0
        %1452 = vmatpush1.bf16.msra.mxu0 0
        %1453 = vmatprep.subr.bf16.mxu0 0
        %1454 = vmatpush1.bf16.msra.mxu0 0
        %1455 = vmatprep.subr.bf16.mxu0 0
        %1456 = vmatpush1.bf16.msra.mxu0 0
        %1457 = vmatprep.subr.bf16.mxu0 0
        %1458 = vmatpush1.bf16.msra.mxu0 0
        %1459 = vmatprep.subr.bf16.mxu0 0
        %1460 = vmatpush1.bf16.msra.mxu0 0
        %1461 = vmatprep.subr.bf16.mxu0 0
        %1462 = vmatpush1.bf16.msra.mxu0 0
        %1463 = vmatprep.subr.bf16.mxu0 0
        %1464 = vmatpush1.bf16.msra.mxu0 0
        %1465 = vmatprep.subr.bf16.mxu0 0
        %1466 = vmatpush1.bf16.msra.mxu0 0
        %1467 = vmatprep.subr.bf16.mxu0 0
        %1468 = vmatpush1.bf16.msra.mxu0 0
        %1469 = vmatprep.subr.bf16.mxu0 0
        %1470 = vmatpush1.bf16.msra.mxu0 0
        %1471 = vmatprep.subr.bf16.mxu0 0
        %1472 = vmatpush1.bf16.msra.mxu0 0
        %1473 = vmatprep.subr.bf16.mxu0 0
        %1474 = vmatpush1.bf16.msra.mxu0 0
        %1475 = vmatprep.subr.bf16.mxu0 0
        %1476 = vmatpush1.bf16.msra.mxu0 0
        %1477 = vmatprep.subr.bf16.mxu0 0
        %1478 = vmatpush1.bf16.msra.mxu0 0
        %1479 = vmatprep.mubr.bf16.mxu0 0
        %1480 = vmatmul.mubr.bf16.gmra.mrb[0].mxu0 %v1442
        %v1481 = vpop.f32.mrb[0].mxu0
        %v1482 = vadd.f32 0.0, %v1481
        %v1483 = vpop.f32.mrb[0].mxu0
        %v1484 = vpop.f32.mrb[0].mxu0
        %v1485 = vpop.f32.mrb[0].mxu0
        %1486 = vdwg.mxu0
        %v1487 = vadd.f32 %v1131, %v1482
        %s1488 = scalar_lea.vmem %s2, 48
        %v1489 = vld [vmem:[%s1488] sm:$0xf]
        %v1490 = vld [vmem:[%s1488 + $0x4] sm:$0xf]
        %v1491 = vld [vmem:[%s1488 + $0x8] sm:$0xf]
        %v1492 = vld [vmem:[%s1488 + $0xc] sm:$0xf]
        %s1493 = scalar_lea.vmem %s3, 3
        %v1494 = vld [vmem:[%s1493] sm:$0x1]
        %v1496 = vlaneseq
        %v1497 = vshrl.u32 %v1496, 7
        %v1498 = vsub.s32 0, %v1497
        %v1499 = vrot.slane %v1494, %v1498
        %v1505 = vunpack.c.l.b16 %v1489
        %v1506 = vunpack.c.l.b16 %v1490
        %v1507 = vunpack.c.l.b16 %v1491
        %v1508 = vunpack.c.l.b16 %v1492
        %v1509 = vpack.c.b16 %v1506, %v1505
        %v1510 = vpack.c.b16 %v1508, %v1507
        %1513 = vmatprep.subr.bf16.mxu0 0
        %1514 = vmatpush1.bf16.msra.mxu0 %v1509
        %1515 = vmatprep.subr.bf16.mxu0 0
        %1516 = vmatpush1.bf16.msra.mxu0 %v1510
        %1517 = vmatprep.subr.bf16.mxu0 0
        %1518 = vmatpush1.bf16.msra.mxu0 0
        %1519 = vmatprep.subr.bf16.mxu0 0
        %1520 = vmatpush1.bf16.msra.mxu0 0
        %1521 = vmatprep.subr.bf16.mxu0 0
        %1522 = vmatpush1.bf16.msra.mxu0 0
        %1523 = vmatprep.subr.bf16.mxu0 0
        %1524 = vmatpush1.bf16.msra.mxu0 0
        %1525 = vmatprep.subr.bf16.mxu0 0
        %1526 = vmatpush1.bf16.msra.mxu0 0
        %1527 = vmatprep.subr.bf16.mxu0 0
        %1528 = vmatpush1.bf16.msra.mxu0 0
        %1529 = vmatprep.subr.bf16.mxu0 0
        %1530 = vmatpush1.bf16.msra.mxu0 0
        %1531 = vmatprep.subr.bf16.mxu0 0
        %1532 = vmatpush1.bf16.msra.mxu0 0
        %1533 = vmatprep.subr.bf16.mxu0 0
        %1534 = vmatpush1.bf16.msra.mxu0 0
        %1535 = vmatprep.subr.bf16.mxu0 0
        %1536 = vmatpush1.bf16.msra.mxu0 0
        %1537 = vmatprep.subr.bf16.mxu0 0
        %1538 = vmatpush1.bf16.msra.mxu0 0
        %1539 = vmatprep.subr.bf16.mxu0 0
        %1540 = vmatpush1.bf16.msra.mxu0 0
        %1541 = vmatprep.subr.bf16.mxu0 0
        %1542 = vmatpush1.bf16.msra.mxu0 0
        %1543 = vmatprep.subr.bf16.mxu0 0
        %1544 = vmatpush1.bf16.msra.mxu0 0
        %1545 = vmatprep.mubr.bf16.mxu0 0
        %1546 = vmatmul.mubr.bf16.gmra.mrb[0].mxu0 %v457
        %v1547 = vpop.f32.mrb[0].mxu0
        %v1548 = vadd.f32 %v1499, %v1547
        %v1549 = vpop.f32.mrb[0].mxu0
        %v1550 = vpop.f32.mrb[0].mxu0
        %v1551 = vpop.f32.mrb[0].mxu0
        %1552 = vdwg.mxu0
        %s1553 = scalar_lea.vmem %s4, 48
        %v1554 = vld [vmem:[%s1553] sm:$0xf]
        %v1555 = vld [vmem:[%s1553 + $0x4] sm:$0xf]
        %v1556 = vld [vmem:[%s1553 + $0x8] sm:$0xf]
        %v1557 = vld [vmem:[%s1553 + $0xc] sm:$0xf]
        %s1558 = scalar_lea.vmem %s5, 3
        %v1559 = vld [vmem:[%s1558] sm:$0x1]
        %v1561 = vlaneseq
        %v1562 = vshrl.u32 %v1561, 7
        %v1563 = vsub.s32 0, %v1562
        %v1564 = vrot.slane %v1559, %v1563
        %v1570 = vunpack.c.l.b16 %v1554
        %v1571 = vunpack.c.l.b16 %v1555
        %v1572 = vunpack.c.l.b16 %v1556
        %v1573 = vunpack.c.l.b16 %v1557
        %v1574 = vpack.c.b16 %v1571, %v1570
        %v1575 = vpack.c.b16 %v1573, %v1572
        %1578 = vmatprep.subr.bf16.mxu0 0
        %1579 = vmatpush1.bf16.msra.mxu0 %v1574
        %1580 = vmatprep.subr.bf16.mxu0 0
        %1581 = vmatpush1.bf16.msra.mxu0 %v1575
        %1582 = vmatprep.subr.bf16.mxu0 0
        %1583 = vmatpush1.bf16.msra.mxu0 0
        %1584 = vmatprep.subr.bf16.mxu0 0
        %1585 = vmatpush1.bf16.msra.mxu0 0
        %1586 = vmatprep.subr.bf16.mxu0 0
        %1587 = vmatpush1.bf16.msra.mxu0 0
        %1588 = vmatprep.subr.bf16.mxu0 0
        %1589 = vmatpush1.bf16.msra.mxu0 0
        %1590 = vmatprep.subr.bf16.mxu0 0
        %1591 = vmatpush1.bf16.msra.mxu0 0
        %1592 = vmatprep.subr.bf16.mxu0 0
        %1593 = vmatpush1.bf16.msra.mxu0 0
        %1594 = vmatprep.subr.bf16.mxu0 0
        %1595 = vmatpush1.bf16.msra.mxu0 0
        %1596 = vmatprep.subr.bf16.mxu0 0
        %1597 = vmatpush1.bf16.msra.mxu0 0
        %1598 = vmatprep.subr.bf16.mxu0 0
        %1599 = vmatpush1.bf16.msra.mxu0 0
        %1600 = vmatprep.subr.bf16.mxu0 0
        %1601 = vmatpush1.bf16.msra.mxu0 0
        %1602 = vmatprep.subr.bf16.mxu0 0
        %1603 = vmatpush1.bf16.msra.mxu0 0
        %1604 = vmatprep.subr.bf16.mxu0 0
        %1605 = vmatpush1.bf16.msra.mxu0 0
        %1606 = vmatprep.subr.bf16.mxu0 0
        %1607 = vmatpush1.bf16.msra.mxu0 0
        %1608 = vmatprep.subr.bf16.mxu0 0
        %1609 = vmatpush1.bf16.msra.mxu0 0
        %1610 = vmatprep.mubr.bf16.mxu0 0
        %1611 = vmatmul.mubr.bf16.gmra.mrb[0].mxu0 %v457
        %v1612 = vpop.f32.mrb[0].mxu0
        %v1613 = vadd.f32 %v1564, %v1612
        %v1614 = vpop.f32.mrb[0].mxu0
        %v1615 = vpop.f32.mrb[0].mxu0
        %v1616 = vpop.f32.mrb[0].mxu0
        %1617 = vdwg.mxu0
        %s1618 = scalar_lea.vmem %s6, 48
        %v1619 = vld [vmem:[%s1618] sm:$0xf]
        %v1620 = vld [vmem:[%s1618 + $0x4] sm:$0xf]
        %v1621 = vld [vmem:[%s1618 + $0x8] sm:$0xf]
        %v1622 = vld [vmem:[%s1618 + $0xc] sm:$0xf]
        %s1623 = scalar_lea.vmem %s7, 3
        %v1624 = vld [vmem:[%s1623] sm:$0x1]
        %v1626 = vlaneseq
        %v1627 = vshrl.u32 %v1626, 7
        %v1628 = vsub.s32 0, %v1627
        %v1629 = vrot.slane %v1624, %v1628
        %v1635 = vunpack.c.l.b16 %v1619
        %v1636 = vunpack.c.l.b16 %v1620
        %v1637 = vunpack.c.l.b16 %v1621
        %v1638 = vunpack.c.l.b16 %v1622
        %v1639 = vpack.c.b16 %v1636, %v1635
        %v1640 = vpack.c.b16 %v1638, %v1637
        %1643 = vmatprep.subr.bf16.mxu0 0
        %1644 = vmatpush1.bf16.msra.mxu0 %v1639
        %1645 = vmatprep.subr.bf16.mxu0 0
        %1646 = vmatpush1.bf16.msra.mxu0 %v1640
        %1647 = vmatprep.subr.bf16.mxu0 0
        %1648 = vmatpush1.bf16.msra.mxu0 0
        %1649 = vmatprep.subr.bf16.mxu0 0
        %1650 = vmatpush1.bf16.msra.mxu0 0
        %1651 = vmatprep.subr.bf16.mxu0 0
        %1652 = vmatpush1.bf16.msra.mxu0 0
        %1653 = vmatprep.subr.bf16.mxu0 0
        %1654 = vmatpush1.bf16.msra.mxu0 0
        %1655 = vmatprep.subr.bf16.mxu0 0
        %1656 = vmatpush1.bf16.msra.mxu0 0
        %1657 = vmatprep.subr.bf16.mxu0 0
        %1658 = vmatpush1.bf16.msra.mxu0 0
        %1659 = vmatprep.subr.bf16.mxu0 0
        %1660 = vmatpush1.bf16.msra.mxu0 0
        %1661 = vmatprep.subr.bf16.mxu0 0
        %1662 = vmatpush1.bf16.msra.mxu0 0
        %1663 = vmatprep.subr.bf16.mxu0 0
        %1664 = vmatpush1.bf16.msra.mxu0 0
        %1665 = vmatprep.subr.bf16.mxu0 0
        %1666 = vmatpush1.bf16.msra.mxu0 0
        %1667 = vmatprep.subr.bf16.mxu0 0
        %1668 = vmatpush1.bf16.msra.mxu0 0
        %1669 = vmatprep.subr.bf16.mxu0 0
        %1670 = vmatpush1.bf16.msra.mxu0 0
        %1671 = vmatprep.subr.bf16.mxu0 0
        %1672 = vmatpush1.bf16.msra.mxu0 0
        %1673 = vmatprep.subr.bf16.mxu0 0
        %1674 = vmatpush1.bf16.msra.mxu0 0
        %1675 = vmatprep.mubr.bf16.mxu0 0
        %1676 = vmatmul.mubr.bf16.gmra.mrb[0].mxu0 %v586
        %v1677 = vpop.f32.mrb[0].mxu0
        %v1678 = vadd.f32 %v1629, %v1677
        %v1679 = vpop.f32.mrb[0].mxu0
        %v1680 = vpop.f32.mrb[0].mxu0
        %v1681 = vpop.f32.mrb[0].mxu0
        %1682 = vdwg.mxu0
        %v1683 = vpack.c.bf16 %v1548, %v1548
        %v1684 = vpack.c.bf16 %v1613, %v1613
        %v1686 = vsel %vm630, %v1683, 0
        %v1689 = vsel %vm630, %v1684, 0
        %1691 = vmatprep.subr.bf16.mxu0 0
        %1692 = vmatpush1.bf16.xpose.msra.mxu0 %v1689
        %1693 = vmatprep.subr.bf16.mxu0 0
        %1694 = vmatpush1.bf16.xpose.msra.mxu0 0
        %1695 = vmatprep.subr.bf16.mxu0 0
        %1696 = vmatpush1.bf16.xpose.msra.mxu0 0
        %1697 = vmatprep.subr.bf16.mxu0 0
        %1698 = vmatpush1.bf16.xpose.msra.mxu0 0
        %1699 = vmatprep.subr.bf16.mxu0 0
        %1700 = vmatpush1.bf16.xpose.msra.mxu0 0
        %1701 = vmatprep.subr.bf16.mxu0 0
        %1702 = vmatpush1.bf16.xpose.msra.mxu0 0
        %1703 = vmatprep.subr.bf16.mxu0 0
        %1704 = vmatpush1.bf16.xpose.msra.mxu0 0
        %1705 = vmatprep.subr.bf16.mxu0 0
        %1706 = vmatpush1.bf16.xpose.msra.mxu0 0
        %1707 = vmatprep.subr.bf16.mxu0 0
        %1708 = vmatpush1.bf16.xpose.msra.mxu0 0
        %1709 = vmatprep.subr.bf16.mxu0 0
        %1710 = vmatpush1.bf16.xpose.msra.mxu0 0
        %1711 = vmatprep.subr.bf16.mxu0 0
        %1712 = vmatpush1.bf16.xpose.msra.mxu0 0
        %1713 = vmatprep.subr.bf16.mxu0 0
        %1714 = vmatpush1.bf16.xpose.msra.mxu0 0
        %1715 = vmatprep.subr.bf16.mxu0 0
        %1716 = vmatpush1.bf16.xpose.msra.mxu0 0
        %1717 = vmatprep.subr.bf16.mxu0 0
        %1718 = vmatpush1.bf16.xpose.msra.mxu0 0
        %1719 = vmatprep.subr.bf16.mxu0 0
        %1720 = vmatpush1.bf16.xpose.msra.mxu0 0
        %1721 = vmatprep.subr.bf16.mxu0 0
        %1722 = vmatpush1.bf16.xpose.msra.mxu0 0
        %1723 = vmatprep.mubr.bf16.mxu0 0
        %1724 = vmatmul.mubr.bf16.gmra.mrb[0].mxu0 %v1686
        %v1725 = vpop.f32.mrb[0].mxu0
        %v1726 = vadd.f32 0.0, %v1725
        %v1727 = vpop.f32.mrb[0].mxu0
        %v1728 = vpop.f32.mrb[0].mxu0
        %v1729 = vpop.f32.mrb[0].mxu0
        %1730 = vdwg.mxu0
        %v1731 = vsel %vm630, %v1726, -inf
        %1732 = vmax.xlane.f32.xlu0 %v1731
        %v1733 = vpop.xlane.xlu0 %1732
        %v1734 = vsub.f32 %v1726, %v1733
        %v1735 = vmul.f32 %v1734, 1.442695
        %v1736 = vpow.pop %v1735
        %v1737 = vsel %vm630, %v1736, 0.0
        %1738 = vadd.xlane.f32.xlu0 %v1737
        %v1739 = vpop.xlane.xlu0 %1738
        %v1740 = vpack.c.bf16 %v1736, %v1736
        %v1741 = vpack.c.bf16 %v1678, %v1678
        %v1743 = vsel %vm630, %v1740, 0
        %v1746 = vsel %vm691, %v1741, 0
        %1748 = vmatprep.subr.bf16.mxu0 0
        %1749 = vmatpush1.bf16.msra.mxu0 %v1746
        %1750 = vmatprep.subr.bf16.mxu0 0
        %1751 = vmatpush1.bf16.msra.mxu0 0
        %1752 = vmatprep.subr.bf16.mxu0 0
        %1753 = vmatpush1.bf16.msra.mxu0 0
        %1754 = vmatprep.subr.bf16.mxu0 0
        %1755 = vmatpush1.bf16.msra.mxu0 0
        %1756 = vmatprep.subr.bf16.mxu0 0
        %1757 = vmatpush1.bf16.msra.mxu0 0
        %1758 = vmatprep.subr.bf16.mxu0 0
        %1759 = vmatpush1.bf16.msra.mxu0 0
        %1760 = vmatprep.subr.bf16.mxu0 0
        %1761 = vmatpush1.bf16.msra.mxu0 0
        %1762 = vmatprep.subr.bf16.mxu0 0
        %1763 = vmatpush1.bf16.msra.mxu0 0
        %1764 = vmatprep.subr.bf16.mxu0 0
        %1765 = vmatpush1.bf16.msra.mxu0 0
        %1766 = vmatprep.subr.bf16.mxu0 0
        %1767 = vmatpush1.bf16.msra.mxu0 0
        %1768 = vmatprep.subr.bf16.mxu0 0
        %1769 = vmatpush1.bf16.msra.mxu0 0
        %1770 = vmatprep.subr.bf16.mxu0 0
        %1771 = vmatpush1.bf16.msra.mxu0 0
        %1772 = vmatprep.subr.bf16.mxu0 0
        %1773 = vmatpush1.bf16.msra.mxu0 0
        %1774 = vmatprep.subr.bf16.mxu0 0
        %1775 = vmatpush1.bf16.msra.mxu0 0
        %1776 = vmatprep.subr.bf16.mxu0 0
        %1777 = vmatpush1.bf16.msra.mxu0 0
        %1778 = vmatprep.subr.bf16.mxu0 0
        %1779 = vmatpush1.bf16.msra.mxu0 0
        %1780 = vmatprep.mubr.bf16.mxu0 0
        %1781 = vmatmul.mubr.bf16.gmra.mrb[0].mxu0 %v1743
        %v1782 = vpop.f32.mrb[0].mxu0
        %v1783 = vadd.f32 0.0, %v1782
        %v1784 = vpop.f32.mrb[0].mxu0
        %v1785 = vpop.f32.mrb[0].mxu0
        %v1786 = vpop.f32.mrb[0].mxu0
        %1787 = vdwg.mxu0
        %v1788 = vrcp.pop %v1739
        %v1789 = vmul.f32 %v1783, %v1788
        %v1790 = vpack.c.bf16 %v1789, %v1789
        %s1791 = scalar_lea.vmem %s8, 12
        %v1792 = vld [vmem:[%s1791] sm:$0xf]
        %v1794 = vsel %vm630, %v1790, 0
        %v1797 = vsel %vm691, %v1792, 0
        %1799 = vmatprep.subr.bf16.mxu0 0
        %1800 = vmatpush1.bf16.msra.mxu0 %v1797
        %1801 = vmatprep.subr.bf16.mxu0 0
        %1802 = vmatpush1.bf16.msra.mxu0 0
        %1803 = vmatprep.subr.bf16.mxu0 0
        %1804 = vmatpush1.bf16.msra.mxu0 0
        %1805 = vmatprep.subr.bf16.mxu0 0
        %1806 = vmatpush1.bf16.msra.mxu0 0
        %1807 = vmatprep.subr.bf16.mxu0 0
        %1808 = vmatpush1.bf16.msra.mxu0 0
        %1809 = vmatprep.subr.bf16.mxu0 0
        %1810 = vmatpush1.bf16.msra.mxu0 0
        %1811 = vmatprep.subr.bf16.mxu0 0
        %1812 = vmatpush1.bf16.msra.mxu0 0
        %1813 = vmatprep.subr.bf16.mxu0 0
        %1814 = vmatpush1.bf16.msra.mxu0 0
        %1815 = vmatprep.subr.bf16.mxu0 0
        %1816 = vmatpush1.bf16.msra.mxu0 0
        %1817 = vmatprep.subr.bf16.mxu0 0
        %1818 = vmatpush1.bf16.msra.mxu0 0
        %1819 = vmatprep.subr.bf16.mxu0 0
        %1820 = vmatpush1.bf16.msra.mxu0 0
        %1821 = vmatprep.subr.bf16.mxu0 0
        %1822 = vmatpush1.bf16.msra.mxu0 0
        %1823 = vmatprep.subr.bf16.mxu0 0
        %1824 = vmatpush1.bf16.msra.mxu0 0
        %1825 = vmatprep.subr.bf16.mxu0 0
        %1826 = vmatpush1.bf16.msra.mxu0 0
        %1827 = vmatprep.subr.bf16.mxu0 0
        %1828 = vmatpush1.bf16.msra.mxu0 0
        %1829 = vmatprep.subr.bf16.mxu0 0
        %1830 = vmatpush1.bf16.msra.mxu0 0
        %1831 = vmatprep.mubr.bf16.mxu0 0
        %1832 = vmatmul.mubr.bf16.gmra.mrb[0].mxu0 %v1794
        %v1833 = vpop.f32.mrb[0].mxu0
        %v1834 = vadd.f32 0.0, %v1833
        %v1835 = vpop.f32.mrb[0].mxu0
        %v1836 = vpop.f32.mrb[0].mxu0
        %v1837 = vpop.f32.mrb[0].mxu0
        %1838 = vdwg.mxu0
        %v1839 = vadd.f32 %v1487, %v1834
        %v1840 = vadd.f32 %v427, %v1839
        %v1841 = vld [vmem:[%s9] sm:$0x1]
        %v1843 = vlaneseq
        %v1844 = vshrl.u32 %v1843, 7
        %v1845 = vsub.s32 0, %v1844
        %v1846 = vrot.slane %v1841, %v1845
        %v1848 = vadd.f32 %v1840, %v1846
        %v1849 = vld [vmem:[%s10] sm:$0x1]
        %v1850 = vld [vmem:[%s11] sm:$0x1]
        %v1851 = vsel %vm455, %v1848, 0.0
        %1852 = vadd.xlane.f32.xlu0 %v1851
        %v1853 = vpop.xlane.xlu0 %1852
        %v1854 = vrcp.pop 32.0
        %v1855 = vmul.f32 %v1853, %v1854
        %v1856 = vsub.f32 %v1848, %v1855
        %v1857 = vmul.f32 %v1856, %v1856
        %v1858 = vsel %vm455, %v1857, 0.0
        %1859 = vadd.xlane.f32.xlu0 %v1858
        %v1860 = vpop.xlane.xlu0 %1859
        %v1861 = vmul.f32 %v1860, %v1854
        %v1862 = vadd.f32 %v1861, 1e-05
        %v1863 = vrsqrt.pop %v1862
        %v1864 = vmul.f32 %v1856, %v1863
        %v1866 = vlaneseq
        %v1867 = vshrl.u32 %v1866, 7
        %v1868 = vsub.s32 0, %v1867
        %v1869 = vrot.slane %v1849, %v1868
        %v1871 = vmul.f32 %v1864, %v1869
        %v1873 = vlaneseq
        %v1874 = vshrl.u32 %v1873, 7
        %v1875 = vsub.s32 0, %v1874
        %v1876 = vrot.slane %v1850, %v1875
        %v1878 = vadd.f32 %v1871, %v1876
        %1879 = vst.msk [vmem:[%s417] sm:$0xff] %vm455, %v1878
        %s1880 = sand.u32 %s296, 1
        %s1881 = scalar_lea.sflag [#allocation3], %s1880
        %s1882 = sand.u32 %s296, 1
        %s1883 = smul.addr %s1882, 8
        %s1884 = scalar_lea.vmem [#allocation2], %s1883
        // Predicated region
        $region69: #{tpu_custom_call.1} parent=67 // pred_check
          %p1885 = pneg %p306
        $region70: #{tpu_custom_call.1} parent=67 // pred_check_branch
          %1887 = sbr.rel (%p1885) target = $region72
        $region71: #{tpu_custom_call.1} parent=67 // pred_region
          %s1889 = ssub.s32 128, 128
          %1890 = vsyncadd %s1881, %s1889
          %s1891 = smul.addr %s26, 128
          %s1892 = scalar_lea.hbm %s12, %s1891
          %s1894 = sshll.u32 %s1884, 4
          %s1895 = int_to_ptr.vmem [resolvable:$true] %s1894
          %1897 = dma.vmem_to_hbm [thread:$0]  %s1895, 128, %s1892, %s1881
        $region72: #{tpu_custom_call.1} parent=67 // pred_fallthru
          _
      $region68: #{tpu_custom_call.1} parent=5 // pred_fallthru
        _
      %p1898 = scmp.le.s32.totalorder 2, %s21
      // Predicated region
      $region73: #{tpu_custom_call.1} parent=5 // pred_check
        %p1899 = pneg %p1898
      $region74: #{tpu_custom_call.1} parent=5 // pred_check_branch
        %1901 = sbr.rel (%p1899) target = $region76
      $region75: #{tpu_custom_call.1} parent=5 // pred_region
        %s1902 = ssub.s32 %s21, 2
        // Predicated region
        $region77: #{tpu_custom_call.1} parent=75 // pred_check
          %p1903 = pneg %p312
        $region78: #{tpu_custom_call.1} parent=75 // pred_check_branch
          %1905 = sbr.rel (%p1903) target = $region80
        $region79: #{tpu_custom_call.1} parent=75 // pred_region
          %s1906 = sand.u32 %s297, 1
          %s1907 = scalar_lea.sflag [#allocation3], %s1906
          %s1908 = sand.u32 %s297, 1
          %s1909 = smul.addr %s1908, 8
          %s1910 = scalar_lea.vmem [#allocation2], %s1909
          %1911 = dma.done %s1907, 128
        $region80: #{tpu_custom_call.1} parent=75 // pred_fallthru
          _
      $region76: #{tpu_custom_call.1} parent=5 // pred_fallthru
        _
    $region6: #{tpu_custom_call.1} parent=1 // loop_footer
      %s25 = sadd.s32 1, %s21
    $region7: #{tpu_custom_call.1} parent=1 // loop_footer_branch
      %20 = sbr.rel target = $region3
    $region8: #{tpu_custom_call.1} parent=1 // loop_exit
      _
    %1912 = vsyncpa [#allocation3], 1
    %s1913 = scalar_lea.sflag [#allocation3], 1
    %1914 = vsyncpa %s1913, 1

</llo_original>
